<compile_context>
chip_gen: v7x
topology: tpu7x:2x2x1
jax: 0.10.0
libtpu: 0.0.40
codegen_flags: <defaults>
</compile_context>

<pallas_src>
import numpy as np
import jax
import jax.numpy as jnp
from jax.experimental import pallas as pl
from jax.experimental.pallas import tpu as pltpu

LANE = 128
# <= 48 MiB keeps headroom on v7x's 64 MiB physical VMEM; conservative on
# v5e/v6e (128 MiB), where larger limits / fatter tiles could be used.
VMEM_LIMIT = 48 * 1024 * 1024


# ---------------------------------------------------------------------------
# Separable bilinear-resize factors (PyTorch align_corners=False semantics).
# ---------------------------------------------------------------------------
def _bilinear_matrix(out_size, in_size):
    W = np.zeros((out_size, in_size), dtype=np.float32)
    if in_size == 1:
        W[:, 0] = 1.0
        return W
    scale = in_size / out_size
    for i in range(out_size):
        src = max((i + 0.5) * scale - 0.5, 0.0)      # half-pixel + clamp
        i0 = min(int(np.floor(src)), in_size - 1)
        i1 = min(i0 + 1, in_size - 1)
        w1 = src - i0
        W[i, i0] += 1.0 - w1
        W[i, i1] += w1
    return W


def _round_up(n, m):
    return ((n + m - 1) // m) * m


def _pad2d(a, rows, cols):
    r, c = a.shape
    return jnp.pad(a, ((0, rows - r), (0, cols - c)))


# ---------------------------------------------------------------------------
# Kernel 1: all channel matmuls for one batch element -> low-resolution logits.
# ---------------------------------------------------------------------------
def _head_logits_kernel(high_ref, low_ref, w_cbr_ref, bn_b_ref, w_scale_ref,
                        w_highc_ref, w_lowc_ref, b_cls_ref,
                        hlog_ref, llog_ref):
    high = high_ref[...]                       # (Sh, Chp) bf16
    low = low_ref[...]                         # (Sl, Clp) bf16

    # cbr: 1x1 conv (BN scale pre-folded into w_cbr) + BN bias + ReLU.
    x = jnp.dot(high, w_cbr_ref[...], preferred_element_type=jnp.float32)
    x = jnp.maximum(x + bn_b_ref[...], 0.0)    # (Sh, Cip) f32

    # scale branch: AdaptiveAvgPool2d(1) with f32 accumulation, 1x1 conv,
    # sigmoid (EUP).
    inv_n = 1.0 / high.shape[0]
    pooled = jnp.sum(high, axis=0, keepdims=True, dtype=jnp.float32) * inv_n
    s = jax.nn.sigmoid(jnp.dot(pooled, w_scale_ref[...],
                               preferred_element_type=jnp.float32))   # (1, Cip)

    xs = (x * s).astype(jnp.bfloat16)          # (Sh, Cip)

    # High classifier applied at HIGH resolution (1x1 conv commutes with the
    # bilinear resize); its bias is folded into b_cls and added at low res.
    hlog_ref[...] = jnp.dot(xs, w_highc_ref[...],
                            preferred_element_type=jnp.float32)       # (Sh, Kp)

    # Low classifier (+ summed low/high classifier biases).
    llog_ref[...] = (jnp.dot(low, w_lowc_ref[...],
                             preferred_element_type=jnp.float32)
                     + b_cls_ref[...])                                 # (Sl, Kp)


# ---------------------------------------------------------------------------
# Kernel 2: one (batch, class) plane -> both separable bilinear resizes.
# Every pass is a plain 2D matmul; the resize matrices are shared operands.
# ---------------------------------------------------------------------------
def _plane_resize_kernel(hp_ref, lp_ref, rh1_ref, rw1t_ref, rh2_ref, rw2t_ref,
                         out_ref):
    hp = hp_ref[...]                           # (Hh, Wh) f32 high-cls plane
    lp = lp_ref[...]                           # (Hl, Wl) f32 low-cls plane (+bias)

    # high -> low separable resize of the high-classifier plane.
    t = jnp.dot(rh1_ref[...], hp, preferred_element_type=jnp.float32)   # (Hl, Wh)
    t = jnp.dot(t, rw1t_ref[...], preferred_element_type=jnp.float32)   # (Hl, Wl)
    logit = lp + t

    # low -> input separable resize of the combined logit plane.
    u = jnp.dot(rh2_ref[...], logit, preferred_element_type=jnp.float32)  # (H, Wl)
    out_ref[...] = jnp.dot(u, rw2t_ref[...],
                           preferred_element_type=jnp.float32)            # (H, W)


# ---------------------------------------------------------------------------
# Wrapper: host-side packing + two pallas_calls.
# ---------------------------------------------------------------------------
def lraspp_head_forward(low_feat, high_feat, params, out_hw):
    """low_feat: (B,Hl,Wl,Cl), high_feat: (B,Hh,Wh,Ch) NHWC
       -> NCHW logits (B, num_classes, H, W), same layout as the PyTorch ref."""
    B, Hl, Wl, Cl = low_feat.shape
    _, Hh, Wh, Ch = high_feat.shape
    H, W = out_hw
    Ci = params["w_cbr"].shape[1]
    K = params["w_lowc"].shape[1]

    Chp = _round_up(Ch, LANE)
    Cip = _round_up(Ci, LANE)
    Clp = _round_up(Cl, LANE)
    Kp = _round_up(K, LANE)
    Sh, Sl = Hh * Wh, Hl * Wl

    # ---- host-side packing: lane-pad channels, bf16 for the MXU operands ----
    high_p = jnp.pad(high_feat.reshape(B, Sh, Ch),
                     ((0, 0), (0, 0), (0, Chp - Ch))).astype(jnp.bfloat16)
    low_p = jnp.pad(low_feat.reshape(B, Sl, Cl),
                    ((0, 0), (0, 0), (0, Clp - Cl))).astype(jnp.bfloat16)

    # Inference BN fold: scale into the conv weight, keep only the bias add.
    w_cbr = _pad2d(params["w_cbr"] * params["bn_scale"],
                   Chp, Cip).astype(jnp.bfloat16)
    bn_b = _pad2d(params["bn_bias"], 1, Cip)
    w_scale = _pad2d(params["w_scale"], Chp, Cip)              # f32 (tiny matmul)
    w_highc = _pad2d(params["w_highc"], Cip, Kp).astype(jnp.bfloat16)
    w_lowc = _pad2d(params["w_lowc"], Clp, Kp).astype(jnp.bfloat16)
    b_cls = _pad2d(params["b_lowc"] + params["b_highc"], 1, Kp)

    cparams1 = pltpu.CompilerParams(dimension_semantics=("parallel",),
                                    vmem_limit_bytes=VMEM_LIMIT)
    cparams2 = pltpu.CompilerParams(dimension_semantics=("parallel", "parallel"),
                                    vmem_limit_bytes=VMEM_LIMIT)

    # ---- kernel 1: channel matmuls -> low-resolution logits ----------------
    hlog, llog = pl.pallas_call(
        _head_logits_kernel,
        grid=(B,),
        in_specs=[
            pl.BlockSpec((None, Sh, Chp), lambda b: (b, 0, 0)),
            pl.BlockSpec((None, Sl, Clp), lambda b: (b, 0, 0)),
            pl.BlockSpec((Chp, Cip), lambda b: (0, 0)),
            pl.BlockSpec((1, Cip), lambda b: (0, 0)),
            pl.BlockSpec((Chp, Cip), lambda b: (0, 0)),
            pl.BlockSpec((Cip, Kp), lambda b: (0, 0)),
            pl.BlockSpec((Clp, Kp), lambda b: (0, 0)),
            pl.BlockSpec((1, Kp), lambda b: (0, 0)),
        ],
        out_specs=[
            pl.BlockSpec((None, Sh, Kp), lambda b: (b, 0, 0)),
            pl.BlockSpec((None, Sl, Kp), lambda b: (b, 0, 0)),
        ],
        out_shape=[jax.ShapeDtypeStruct((B, Sh, Kp), jnp.float32),
                   jax.ShapeDtypeStruct((B, Sl, Kp), jnp.float32)],
        compiler_params=cparams1,
    )(high_p, low_p, w_cbr, bn_b, w_scale, w_highc, w_lowc, b_cls)

    # Tiny layout plumbing (a few hundred KB at real LRASPP sizes): drop the
    # class-lane padding and move classes in front so kernel 2 DMAs one
    # spatial plane per (batch, class) grid step.
    hplanes = jnp.transpose(hlog.reshape(B, Hh, Wh, Kp)[..., :K], (0, 3, 1, 2))
    lplanes = jnp.transpose(llog.reshape(B, Hl, Wl, Kp)[..., :K], (0, 3, 1, 2))

    # Separable bilinear factors (align_corners=False), kept f32 so the logits
    # stay f32 through the final upsample.
    rh_h2l = jnp.asarray(_bilinear_matrix(Hl, Hh))       # (Hl, Hh)
    rw_h2l_t = jnp.asarray(_bilinear_matrix(Wl, Wh).T)   # (Wh, Wl)
    rh_l2i = jnp.asarray(_bilinear_matrix(H, Hl))        # (H, Hl)
    rw_l2i_t = jnp.asarray(_bilinear_matrix(W, Wl).T)    # (Wl, W)

    # ---- kernel 2: per-(batch, class) plane resizes -> unpadded NCHW f32 ---
    out = pl.pallas_call(
        _plane_resize_kernel,
        grid=(B, K),
        in_specs=[
            pl.BlockSpec((None, None, Hh, Wh), lambda b, k: (b, k, 0, 0)),
            pl.BlockSpec((None, None, Hl, Wl), lambda b, k: (b, k, 0, 0)),
            pl.BlockSpec((Hl, Hh), lambda b, k: (0, 0)),
            pl.BlockSpec((Wh, Wl), lambda b, k: (0, 0)),
            pl.BlockSpec((H, Hl), lambda b, k: (0, 0)),
            pl.BlockSpec((Wl, W), lambda b, k: (0, 0)),
        ],
        out_specs=pl.BlockSpec((None, None, H, W), lambda b, k: (b, k, 0, 0)),
        out_shape=jax.ShapeDtypeStruct((B, K, H, W), jnp.float32),
        compiler_params=cparams2,
    )(hplanes, lplanes, rh_h2l, rw_h2l_t, rh_l2i, rw_l2i_t)
    return out


# ---------------------------------------------------------------------------
# Pure-JAX f32 reference following the PyTorch op order exactly
# (cbr -> scale -> resize high->low -> classifiers -> resize low->input).
# ---------------------------------------------------------------------------
def _reference_head_nchw(low_feat, high_feat, params, out_hw):
    B, Hl, Wl, _ = low_feat.shape
    _, Hh, Wh, _ = high_feat.shape
    H, W = out_hw
    x = jnp.einsum("bhwc,cd->bhwd", high_feat, params["w_cbr"])
    x = x * params["bn_scale"][0] + params["bn_bias"][0]
    x = jnp.maximum(x, 0.0)
    pooled = jnp.mean(high_feat, axis=(1, 2))
    s = jax.nn.sigmoid(pooled @ params["w_scale"])
    x = x * s[:, None, None, :]
    ry = jnp.asarray(_bilinear_matrix(Hl, Hh))
    rx = jnp.asarray(_bilinear_matrix(Wl, Wh))
    x = jnp.einsum("oh,bhwc->bowc", ry, x)
    x = jnp.einsum("ow,bhwc->bhoc", rx, x)
    logits = (jnp.einsum("bhwc,ck->bhwk", low_feat, params["w_lowc"])
              + params["b_lowc"][0]
              + jnp.einsum("bhwc,ck->bhwk", x, params["w_highc"])
              + params["b_highc"][0])
    ry2 = jnp.asarray(_bilinear_matrix(H, Hl))
    rx2 = jnp.asarray(_bilinear_matrix(W, Wl))
    up = jnp.einsum("oh,bhwk->bowk", ry2, logits)
    up = jnp.einsum("ow,bhwk->bhok", rx2, up)
    return jnp.transpose(up, (0, 3, 1, 2))                 # NCHW


if __name__ == "__main__":
    key = jax.random.PRNGKey(0)
    keys = jax.random.split(key, 12)

    # Small, tile-friendly shapes consistent with the module.
    B, H, W, Cin = 2, 32, 32, 3
    low_channels, high_channels = 8, 16
    num_classes, inter_channels = 6, 16
    Hl = Wl = 16          # low-level feature resolution
    Hh = Wh = 8           # high-level feature resolution

    x = jax.random.normal(keys[0], (B, H, W, Cin), jnp.float32)   # NHWC

    # TODO(synk): stem/backbone are externally supplied modules in LRASPP;
    # modeled here as deterministic plain-JAX 1x1 convs + avg-pool downsamples
    # (glue, not the kernelized hot path).
    w_stem = 0.1 * jax.random.normal(keys[1], (Cin, 16), jnp.float32)
    stem = jnp.einsum("bhwc,cd->bhwd", x, w_stem)
    stem = stem.reshape(B, Hl, 2, Wl, 2, 16).mean(axis=(2, 4))        # (B,16,16,16)

    w_lowf = 0.1 * jax.random.normal(keys[2], (16, low_channels), jnp.float32)
    low_feat = jnp.einsum("bhwc,cd->bhwd", stem, w_lowf)              # (B,16,16,Cl)

    hi_in = stem.reshape(B, Hh, 2, Wh, 2, 16).mean(axis=(2, 4))       # (B,8,8,16)
    w_highf = 0.1 * jax.random.normal(keys[3], (16, high_channels), jnp.float32)
    high_feat = jnp.einsum("bhwc,cd->bhwd", hi_in, w_highf)           # (B,8,8,Ch)

    # --- LRASPPHead parameters (inference-mode BatchNorm folded) ---
    eps = 1e-5
    gamma = 1.0 + 0.1 * jax.random.normal(keys[5], (inter_channels,), jnp.float32)
    beta = 0.1 * jax.random.normal(keys[6], (inter_channels,), jnp.float32)
    run_mean = 0.05 * jax.random.normal(keys[7], (inter_channels,), jnp.float32)
    run_var = jnp.abs(1.0 + 0.1 * jax.random.normal(keys[8], (inter_channels,),
                                                    jnp.float32))
    inv_std = gamma / jnp.sqrt(run_var + eps)

    params = {
        "w_cbr":    0.1 * jax.random.normal(keys[4], (high_channels, inter_channels), jnp.float32),
        "bn_scale": inv_std.reshape(1, inter_channels),
        "bn_bias":  (beta - run_mean * inv_std).reshape(1, inter_channels),
        "w_scale":  0.1 * jax.random.normal(keys[9], (high_channels, inter_channels), jnp.float32),
        "w_lowc":   0.1 * jax.random.normal(keys[10], (low_channels, num_classes), jnp.float32),
        "b_lowc":   0.01 * jnp.arange(num_classes, dtype=jnp.float32).reshape(1, num_classes),
        "w_highc":  0.1 * jax.random.normal(keys[11], (inter_channels, num_classes), jnp.float32),
        "b_highc":  0.02 * jnp.arange(num_classes, dtype=jnp.float32).reshape(1, num_classes),
    }

    out = lraspp_head_forward(low_feat, high_feat, params, (H, W))
    jax.block_until_ready(out)
    assert out.shape == (B, num_classes, H, W)    # NCHW, same layout as PyTorch

    ref = _reference_head_nchw(low_feat, high_feat, params, (H, W))
    err = float(jnp.max(jnp.abs(out - ref)))
    assert err < 2e-2, f"max abs error vs pure-JAX reference: {err}"
    print("KERNEL_OK")
</pallas_src>

<mosaic_0001>
module attributes {stable_mosaic.version = 11 : i64} {
  func.func @_head_logits_kernel(%arg0: i32, %arg1: memref<1x64x128xbf16, #tpu.memory_space<vmem>>, %arg2: memref<1x256x128xbf16, #tpu.memory_space<vmem>>, %arg3: memref<128x128xbf16, #tpu.memory_space<vmem>>, %arg4: memref<1x128xf32, #tpu.memory_space<vmem>>, %arg5: memref<128x128xf32, #tpu.memory_space<vmem>>, %arg6: memref<128x128xbf16, #tpu.memory_space<vmem>>, %arg7: memref<128x128xbf16, #tpu.memory_space<vmem>>, %arg8: memref<1x128xf32, #tpu.memory_space<vmem>>, %arg9: memref<1x64x128xf32, #tpu.memory_space<vmem>>, %arg10: memref<1x256x128xf32, #tpu.memory_space<vmem>>) attributes {dimension_semantics = [#tpu.dimension_semantics<parallel>], iteration_bounds = array<i64: 2>, scalar_prefetch = 0 : i64, scratch_operands = 0 : i64, tpu.core_type = #tpu.core_type<tc>, window_params = [{transform_indices = @transform_0, window_bounds = array<i64: 1, 64, 128>}, {transform_indices = @transform_1, window_bounds = array<i64: 1, 256, 128>}, {pipeline_mode = #tpu.pipeline_mode<synchronous>, transform_indices = @transform_2, window_bounds = array<i64: 128, 128>}, {pipeline_mode = #tpu.pipeline_mode<synchronous>, transform_indices = @transform_3, window_bounds = array<i64: 1, 128>}, {pipeline_mode = #tpu.pipeline_mode<synchronous>, transform_indices = @transform_4, window_bounds = array<i64: 128, 128>}, {pipeline_mode = #tpu.pipeline_mode<synchronous>, transform_indices = @transform_5, window_bounds = array<i64: 128, 128>}, {pipeline_mode = #tpu.pipeline_mode<synchronous>, transform_indices = @transform_6, window_bounds = array<i64: 128, 128>}, {pipeline_mode = #tpu.pipeline_mode<synchronous>, transform_indices = @transform_7, window_bounds = array<i64: 1, 128>}, {transform_indices = @transform_8, window_bounds = array<i64: 1, 64, 128>}, {transform_indices = @transform_9, window_bounds = array<i64: 1, 256, 128>}]} {
    %c0 = arith.constant 0 : index
    %c0_0 = arith.constant 0 : index
    %c0_1 = arith.constant 0 : index
    %0 = vector.load %arg1[%c0, %c0_0, %c0_1] : memref<1x64x128xbf16, #tpu.memory_space<vmem>>, vector<1x64x128xbf16>
    %1 = vector.shape_cast %0 : vector<1x64x128xbf16> to vector<64x128xbf16>
    %c0_2 = arith.constant 0 : index
    %c0_3 = arith.constant 0 : index
    %c0_4 = arith.constant 0 : index
    %2 = vector.load %arg2[%c0_2, %c0_3, %c0_4] : memref<1x256x128xbf16, #tpu.memory_space<vmem>>, vector<1x256x128xbf16>
    %3 = vector.shape_cast %2 : vector<1x256x128xbf16> to vector<256x128xbf16>
    %c0_5 = arith.constant 0 : index
    %c0_6 = arith.constant 0 : index
    %4 = vector.load %arg3[%c0_5, %c0_6] : memref<128x128xbf16, #tpu.memory_space<vmem>>, vector<128x128xbf16>
    %cst = arith.constant dense<0.000000e+00> : vector<64x128xf32>
    %5 = tpu.matmul %1, %4, %cst {dimension_numbers = #tpu.dot_dimension_numbers<[1], [0], [0], [1], [0, 0, 1, 1], [], []>} : vector<64x128xbf16>, vector<128x128xbf16>, vector<64x128xf32> -> vector<64x128xf32>
    %c0_7 = arith.constant 0 : index
    %c0_8 = arith.constant 0 : index
    %6 = vector.load %arg4[%c0_7, %c0_8] : memref<1x128xf32, #tpu.memory_space<vmem>>, vector<1x128xf32>
    %7 = vector.broadcast %6 : vector<1x128xf32> to vector<64x128xf32>
    %8 = arith.addf %5, %7 : vector<64x128xf32>
    %cst_9 = arith.constant 0.000000e+00 : f32
    %9 = vector.broadcast %cst_9 : f32 to vector<64x128xf32>
    %10 = arith.maximumf %8, %9 : vector<64x128xf32>
    %11 = arith.extf %1 : vector<64x128xbf16> to vector<64x128xf32>
    %cst_10 = arith.constant dense<0.000000e+00> : vector<128xf32>
    %12 = vector.multi_reduction <add>, %11, %cst_10 [0] : vector<64x128xf32> to vector<128xf32>
    %13 = vector.shape_cast %12 : vector<128xf32> to vector<1x128xf32>
    %cst_11 = arith.constant 1.562500e-02 : f32
    %14 = vector.broadcast %cst_11 : f32 to vector<1x128xf32>
    %15 = arith.mulf %13, %14 : vector<1x128xf32>
    %c0_12 = arith.constant 0 : index
    %c0_13 = arith.constant 0 : index
    %16 = vector.load %arg5[%c0_12, %c0_13] : memref<128x128xf32, #tpu.memory_space<vmem>>, vector<128x128xf32>
    %cst_14 = arith.constant dense<0.000000e+00> : vector<1x128xf32>
    %17 = tpu.matmul %15, %16, %cst_14 {dimension_numbers = #tpu.dot_dimension_numbers<[1], [0], [0], [1], [0, 0, 1, 1], [], []>} : vector<1x128xf32>, vector<128x128xf32>, vector<1x128xf32> -> vector<1x128xf32>
    %18 = arith.negf %17 : vector<1x128xf32>
    %19 = math.exp %18 : vector<1x128xf32>
    %cst_15 = arith.constant 1.000000e+00 : f32
    %20 = vector.broadcast %cst_15 : f32 to vector<1x128xf32>
    %21 = arith.addf %20, %19 : vector<1x128xf32>
    %22 = arith.divf %20, %21 : vector<1x128xf32>
    %23 = vector.broadcast %22 : vector<1x128xf32> to vector<64x128xf32>
    %24 = arith.mulf %10, %23 : vector<64x128xf32>
    %25 = arith.truncf %24 : vector<64x128xf32> to vector<64x128xbf16>
    %c0_16 = arith.constant 0 : index
    %c0_17 = arith.constant 0 : index
    %26 = vector.load %arg6[%c0_16, %c0_17] : memref<128x128xbf16, #tpu.memory_space<vmem>>, vector<128x128xbf16>
    %cst_18 = arith.constant dense<0.000000e+00> : vector<64x128xf32>
    %27 = tpu.matmul %25, %26, %cst_18 {dimension_numbers = #tpu.dot_dimension_numbers<[1], [0], [0], [1], [0, 0, 1, 1], [], []>} : vector<64x128xbf16>, vector<128x128xbf16>, vector<64x128xf32> -> vector<64x128xf32>
    %c0_19 = arith.constant 0 : index
    %c0_20 = arith.constant 0 : index
    %c0_21 = arith.constant 0 : index
    %28 = vector.load %arg9[%c0_19, %c0_20, %c0_21] : memref<1x64x128xf32, #tpu.memory_space<vmem>>, vector<1x64x128xf32>
    %29 = vector.shape_cast %28 : vector<1x64x128xf32> to vector<64x128xf32>
    %30 = vector.shape_cast %27 : vector<64x128xf32> to vector<1x64x128xf32>
    tpu.vector_store %arg9[%c0_19, %c0_20, %c0_21], %30 {strides = array<i32>} : memref<1x64x128xf32, #tpu.memory_space<vmem>>, vector<1x64x128xf32>,
    %c0_22 = arith.constant 0 : index
    %c0_23 = arith.constant 0 : index
    %31 = vector.load %arg7[%c0_22, %c0_23] : memref<128x128xbf16, #tpu.memory_space<vmem>>, vector<128x128xbf16>
    %cst_24 = arith.constant dense<0.000000e+00> : vector<256x128xf32>
    %32 = tpu.matmul %3, %31, %cst_24 {dimension_numbers = #tpu.dot_dimension_numbers<[1], [0], [0], [1], [0, 0, 1, 1], [], []>} : vector<256x128xbf16>, vector<128x128xbf16>, vector<256x128xf32> -> vector<256x128xf32>
    %c0_25 = arith.constant 0 : index
    %c0_26 = arith.constant 0 : index
    %33 = vector.load %arg8[%c0_25, %c0_26] : memref<1x128xf32, #tpu.memory_space<vmem>>, vector<1x128xf32>
    %34 = vector.broadcast %33 : vector<1x128xf32> to vector<256x128xf32>
    %35 = arith.addf %32, %34 : vector<256x128xf32>
    %c0_27 = arith.constant 0 : index
    %c0_28 = arith.constant 0 : index
    %c0_29 = arith.constant 0 : index
    %36 = vector.load %arg10[%c0_27, %c0_28, %c0_29] : memref<1x256x128xf32, #tpu.memory_space<vmem>>, vector<1x256x128xf32>
    %37 = vector.shape_cast %36 : vector<1x256x128xf32> to vector<256x128xf32>
    %38 = vector.shape_cast %35 : vector<256x128xf32> to vector<1x256x128xf32>
    tpu.vector_store %arg10[%c0_27, %c0_28, %c0_29], %38 {strides = array<i32>} : memref<1x256x128xf32, #tpu.memory_space<vmem>>, vector<1x256x128xf32>,
    return
  }
  func.func @transform_0(%arg0: i32) -> (i32, i32, i32) {
    %c0_i32 = arith.constant 0 : i32
    %c0_i32_0 = arith.constant 0 : i32
    %c0_i32_1 = arith.constant 0 : i32
    return %arg0, %c0_i32, %c0_i32_0 : i32, i32, i32
  }
  func.func @transform_1(%arg0: i32) -> (i32, i32, i32) {
    %c0_i32 = arith.constant 0 : i32
    %c0_i32_0 = arith.constant 0 : i32
    %c0_i32_1 = arith.constant 0 : i32
    return %arg0, %c0_i32, %c0_i32_0 : i32, i32, i32
  }
  func.func @transform_2(%arg0: i32) -> (i32, i32) {
    %c0_i32 = arith.constant 0 : i32
    %c0_i32_0 = arith.constant 0 : i32
    %c0_i32_1 = arith.constant 0 : i32
    return %c0_i32, %c0_i32_0 : i32, i32
  }
  func.func @transform_3(%arg0: i32) -> (i32, i32) {
    %c0_i32 = arith.constant 0 : i32
    %c0_i32_0 = arith.constant 0 : i32
    %c0_i32_1 = arith.constant 0 : i32
    return %c0_i32, %c0_i32_0 : i32, i32
  }
  func.func @transform_4(%arg0: i32) -> (i32, i32) {
    %c0_i32 = arith.constant 0 : i32
    %c0_i32_0 = arith.constant 0 : i32
    %c0_i32_1 = arith.constant 0 : i32
    return %c0_i32, %c0_i32_0 : i32, i32
  }
  func.func @transform_5(%arg0: i32) -> (i32, i32) {
    %c0_i32 = arith.constant 0 : i32
    %c0_i32_0 = arith.constant 0 : i32
    %c0_i32_1 = arith.constant 0 : i32
    return %c0_i32, %c0_i32_0 : i32, i32
  }
  func.func @transform_6(%arg0: i32) -> (i32, i32) {
    %c0_i32 = arith.constant 0 : i32
    %c0_i32_0 = arith.constant 0 : i32
    %c0_i32_1 = arith.constant 0 : i32
    return %c0_i32, %c0_i32_0 : i32, i32
  }
  func.func @transform_7(%arg0: i32) -> (i32, i32) {
    %c0_i32 = arith.constant 0 : i32
    %c0_i32_0 = arith.constant 0 : i32
    %c0_i32_1 = arith.constant 0 : i32
    return %c0_i32, %c0_i32_0 : i32, i32
  }
  func.func @transform_8(%arg0: i32) -> (i32, i32, i32) {
    %c0_i32 = arith.constant 0 : i32
    %c0_i32_0 = arith.constant 0 : i32
    %c0_i32_1 = arith.constant 0 : i32
    return %arg0, %c0_i32, %c0_i32_0 : i32, i32, i32
  }
  func.func @transform_9(%arg0: i32) -> (i32, i32, i32) {
    %c0_i32 = arith.constant 0 : i32
    %c0_i32_0 = arith.constant 0 : i32
    %c0_i32_1 = arith.constant 0 : i32
    return %arg0, %c0_i32, %c0_i32_0 : i32, i32, i32
  }
}

</mosaic_0001>

<llo_original>
// kernel: tpu_custom_call.1
$region0: #{tpu_custom_call.1}
  #allocation0 [shape = 'u32[]', space=smem, size = 0x4, offset = 0x4, fixed_abs, tag = 'smem constant byte address 0x4 - core index']
  #allocation1 [shape = 'u32[144,128]{1,0:T(1,128)}', space=vmem, size = 0x12000, scoped, tag = 'internal scratch']
  %s0 = inlined_call_operand.hbm [shape: bf16[2,64,128], index: 0, kind: input, shape index: {}]
  %s1 = inlined_call_operand.hbm [shape: bf16[2,256,128], index: 1, kind: input, shape index: {}]
  %s2 = inlined_call_operand.hbm [shape: bf16[128,128], index: 2, kind: input, shape index: {}]
  %s3 = inlined_call_operand.vmem [shape: f32[1,128], index: 3, kind: input, shape index: {}]
  %s4 = inlined_call_operand.hbm [shape: f32[128,128], index: 4, kind: input, shape index: {}]
  %s5 = inlined_call_operand.hbm [shape: bf16[128,128], index: 5, kind: input, shape index: {}]
  %s6 = inlined_call_operand.hbm [shape: bf16[128,128], index: 6, kind: input, shape index: {}]
  %s7 = inlined_call_operand.vmem [shape: f32[1,128], index: 7, kind: input, shape index: {}]
  %s8 = inlined_call_operand.hbm [shape: f32[2,64,128], index: 8, kind: output, shape index: {0}]
  %s9 = inlined_call_operand.hbm [shape: f32[2,256,128], index: 9, kind: output, shape index: {1}]
  %10 = xla_tuple %s8, %s9
  %s11 = sld [smem:[#allocation0]]
  $region97: #{tpu_custom_call.1} parent=0
    _
  %s13 = ssub.s32 1, %s11
  %s14 = scalar_select 0, %s13, %s11
  $region1: #{tpu_custom_call.1} parent=0
    #allocation2 [shape = 'u8[32768]{0}', space=vmem, size = 0x8000, scoped, tag = 'input window, operand 0']
    #allocation3 [shape = 's32[2]{0}', space=sflag, size = 0x8, scoped, tag = 'scoped memory for tpu_custom_call.1']
    #allocation4 [shape = 's32[2]{0}', space=sflag, size = 0x8, scoped, tag = 'scoped memory for tpu_custom_call.1']
    #allocation5 [shape = 'u8[131072]{0}', space=vmem, size = 0x20000, scoped, tag = 'input window, operand 1']
    #allocation6 [shape = 's32[2]{0}', space=sflag, size = 0x8, scoped, tag = 'scoped memory for tpu_custom_call.1']
    #allocation7 [shape = 'u8[32768]{0}', space=vmem, size = 0x8000, scoped, tag = 'input window, operand 2, single buffered']
    #allocation8 [shape = 'u8[65536]{0}', space=vmem, size = 0x10000, scoped, tag = 'input window, operand 4, single buffered']
    #allocation9 [shape = 's32[1]{0}', space=sflag, size = 0x4, scoped, tag = 'scoped memory for tpu_custom_call.1']
    #allocation10 [shape = 'u8[32768]{0}', space=vmem, size = 0x8000, scoped, tag = 'input window, operand 5, single buffered']
    #allocation11 [shape = 'u8[32768]{0}', space=vmem, size = 0x8000, scoped, tag = 'input window, operand 6, single buffered']
    #allocation12 [shape = 's32[1]{0}', space=sflag, size = 0x4, scoped, tag = 'scoped memory for tpu_custom_call.1']
    #allocation13 [shape = 'u8[65536]{0}', space=vmem, size = 0x10000, scoped, tag = 'output window, operand 0']
    #allocation14 [shape = 'u8[262144]{0}', space=vmem, size = 0x40000, scoped, tag = 'output window, operand 1']
    #allocation15 [shape = 's32[2]{0}', space=sflag, size = 0x8, scoped, tag = 'scoped memory for tpu_custom_call.1']
    %15 = vsyncpa [#allocation3], 0
    %s16 = scalar_lea.sflag [#allocation3], 1
    %17 = vsyncpa %s16, 0
    %18 = vsyncpa [#allocation6], 0
    %s19 = scalar_lea.sflag [#allocation6], 1
    %20 = vsyncpa %s19, 0
    %21 = vsyncpa [#allocation9], 0
    %22 = vsyncpa [#allocation12], 0
    %23 = vsyncpa [#allocation4], 0
    %s24 = scalar_lea.sflag [#allocation4], 1
    %25 = vsyncpa %s24, 0
    %26 = vsyncpa [#allocation15], 0
    %s27 = scalar_lea.sflag [#allocation15], 1
    %28 = vsyncpa %s27, 0
    loop: start=0, step=1, limit=4
    $region2: #{tpu_custom_call.1} parent=1 // loop_pre_header
      _
    $region3: #{tpu_custom_call.1} parent=1 // loop_header
      %s30 = sphi 0, %s34
      %p31 = scmp.ge.s32.totalorder %s30, 4
      %s40 = sphi 0, %s42
      %s43 = sphi 0, %s40
      %s44 = sphi 0, %s43
      %s60 = sphi 0, %s44
      %s66 = sphi 0, %s68
      %s69 = sphi 0, %s66
      %s70 = sphi 0, %s69
      %s86 = sphi 0, %s70
      %s90 = sphi 0, %s90
      %s92 = sphi 0, %s90
      %s93 = sphi 0, %s92
      %s107 = sphi 0, %s93
      %s111 = sphi 0, %s111
      %s113 = sphi 0, %s111
      %s114 = sphi 0, %s113
      %s128 = sphi 0, %s114
      %s132 = sphi 0, %s132
      %s134 = sphi 0, %s132
      %s135 = sphi 0, %s134
      %s149 = sphi 0, %s135
      %s153 = sphi 0, %s153
      %s155 = sphi 0, %s153
      %s156 = sphi 0, %s155
      %s170 = sphi 0, %s156
      %s174 = sphi 0, %s174
      %s176 = sphi 0, %s174
      %s177 = sphi 0, %s176
      %s191 = sphi 0, %s177
      %s195 = sphi 0, %s195
      %s197 = sphi 0, %s195
      %s198 = sphi 0, %s197
      %s212 = sphi 0, %s198
      %s218 = sphi 0, %s220
      %s221 = sphi 0, %s218
      %s222 = sphi 0, %s221
      %s238 = sphi 0, %s222
      %s244 = sphi 0, %s246
      %s247 = sphi 0, %s244
      %s248 = sphi 0, %s247
      %s264 = sphi 0, %s248
    $region4: #{tpu_custom_call.1} parent=1 // loop_header_branch
      %33 = sbr.rel (%p31) target = $region8
    $region5: #{tpu_custom_call.1} parent=1 // loop_body
      %s35 = ssub.s32 %s30, 1
      %s36 = ssub.s32 %s30, 2
      %s37 = sadd.s32 %s30, 1
      %s38 = ssub.s32 %s30, %s37
      %p39 = scmp.eq.s32.totalorder %s38, 0
      %s41 = sadd.s32 %s40, 1
      %s42 = scalar_select %p39, %s40, %s41
      %p45 = pneg %p39
      %p46 = scmp.eq.s32.totalorder %s30, 1
      %p47 = por %p45, %p46
      %p48 = scmp.ne.s32.totalorder %s40, %s43
      %p49 = scmp.eq.s32.totalorder %s30, 0
      %p50 = por %p48, %p49
      %p51 = scmp.ne.s32.totalorder %s40, %s43
      %p52 = scmp.eq.s32.totalorder %s35, 1
      %p53 = por %p51, %p52
      %p54 = scmp.ne.s32.totalorder %s43, %s44
      %p55 = scmp.eq.s32.totalorder %s35, 0
      %p56 = por %p54, %p55
      %p57 = scmp.ne.s32.totalorder %s43, %s44
      %p58 = scmp.eq.s32.totalorder %s36, 1
      %p59 = por %p57, %p58
      %p61 = scmp.ne.s32.totalorder %s44, %s60
      %p62 = scmp.eq.s32.totalorder %s36, 0
      %p63 = por %p61, %p62
      %s64 = ssub.s32 %s30, %s37
      %p65 = scmp.eq.s32.totalorder %s64, 0
      %s67 = sadd.s32 %s66, 1
      %s68 = scalar_select %p65, %s66, %s67
      %p71 = pneg %p65
      %p72 = scmp.eq.s32.totalorder %s30, 1
      %p73 = por %p71, %p72
      %p74 = scmp.ne.s32.totalorder %s66, %s69
      %p75 = scmp.eq.s32.totalorder %s30, 0
      %p76 = por %p74, %p75
      %p77 = scmp.ne.s32.totalorder %s66, %s69
      %p78 = scmp.eq.s32.totalorder %s35, 1
      %p79 = por %p77, %p78
      %p80 = scmp.ne.s32.totalorder %s69, %s70
      %p81 = scmp.eq.s32.totalorder %s35, 0
      %p82 = por %p80, %p81
      %p83 = scmp.ne.s32.totalorder %s69, %s70
      %p84 = scmp.eq.s32.totalorder %s36, 1
      %p85 = por %p83, %p84
      %p87 = scmp.ne.s32.totalorder %s70, %s86
      %p88 = scmp.eq.s32.totalorder %s36, 0
      %p89 = por %p87, %p88
      %s91 = sadd.s32 %s90, 1
      %p94 = scmp.eq.s32.totalorder %s30, 1
      %p95 = scmp.ne.s32.totalorder %s90, %s92
      %p96 = scmp.eq.s32.totalorder %s30, 0
      %p97 = por %p95, %p96
      %p98 = scmp.ne.s32.totalorder %s90, %s92
      %p99 = scmp.eq.s32.totalorder %s35, 1
      %p100 = por %p98, %p99
      %p101 = scmp.ne.s32.totalorder %s92, %s93
      %p102 = scmp.eq.s32.totalorder %s35, 0
      %p103 = por %p101, %p102
      %p104 = scmp.ne.s32.totalorder %s92, %s93
      %p105 = scmp.eq.s32.totalorder %s36, 1
      %p106 = por %p104, %p105
      %p108 = scmp.ne.s32.totalorder %s93, %s107
      %p109 = scmp.eq.s32.totalorder %s36, 0
      %p110 = por %p108, %p109
      %s112 = sadd.s32 %s111, 1
      %p115 = scmp.eq.s32.totalorder %s30, 1
      %p116 = scmp.ne.s32.totalorder %s111, %s113
      %p117 = scmp.eq.s32.totalorder %s30, 0
      %p118 = por %p116, %p117
      %p119 = scmp.ne.s32.totalorder %s111, %s113
      %p120 = scmp.eq.s32.totalorder %s35, 1
      %p121 = por %p119, %p120
      %p122 = scmp.ne.s32.totalorder %s113, %s114
      %p123 = scmp.eq.s32.totalorder %s35, 0
      %p124 = por %p122, %p123
      %p125 = scmp.ne.s32.totalorder %s113, %s114
      %p126 = scmp.eq.s32.totalorder %s36, 1
      %p127 = por %p125, %p126
      %p129 = scmp.ne.s32.totalorder %s114, %s128
      %p130 = scmp.eq.s32.totalorder %s36, 0
      %p131 = por %p129, %p130
      %s133 = sadd.s32 %s132, 1
      %p136 = scmp.eq.s32.totalorder %s30, 1
      %p137 = scmp.ne.s32.totalorder %s132, %s134
      %p138 = scmp.eq.s32.totalorder %s30, 0
      %p139 = por %p137, %p138
      %p140 = scmp.ne.s32.totalorder %s132, %s134
      %p141 = scmp.eq.s32.totalorder %s35, 1
      %p142 = por %p140, %p141
      %p143 = scmp.ne.s32.totalorder %s134, %s135
      %p144 = scmp.eq.s32.totalorder %s35, 0
      %p145 = por %p143, %p144
      %p146 = scmp.ne.s32.totalorder %s134, %s135
      %p147 = scmp.eq.s32.totalorder %s36, 1
      %p148 = por %p146, %p147
      %p150 = scmp.ne.s32.totalorder %s135, %s149
      %p151 = scmp.eq.s32.totalorder %s36, 0
      %p152 = por %p150, %p151
      %s154 = sadd.s32 %s153, 1
      %p157 = scmp.eq.s32.totalorder %s30, 1
      %p158 = scmp.ne.s32.totalorder %s153, %s155
      %p159 = scmp.eq.s32.totalorder %s30, 0
      %p160 = por %p158, %p159
      %p161 = scmp.ne.s32.totalorder %s153, %s155
      %p162 = scmp.eq.s32.totalorder %s35, 1
      %p163 = por %p161, %p162
      %p164 = scmp.ne.s32.totalorder %s155, %s156
      %p165 = scmp.eq.s32.totalorder %s35, 0
      %p166 = por %p164, %p165
      %p167 = scmp.ne.s32.totalorder %s155, %s156
      %p168 = scmp.eq.s32.totalorder %s36, 1
      %p169 = por %p167, %p168
      %p171 = scmp.ne.s32.totalorder %s156, %s170
      %p172 = scmp.eq.s32.totalorder %s36, 0
      %p173 = por %p171, %p172
      %s175 = sadd.s32 %s174, 1
      %p178 = scmp.eq.s32.totalorder %s30, 1
      %p179 = scmp.ne.s32.totalorder %s174, %s176
      %p180 = scmp.eq.s32.totalorder %s30, 0
      %p181 = por %p179, %p180
      %p182 = scmp.ne.s32.totalorder %s174, %s176
      %p183 = scmp.eq.s32.totalorder %s35, 1
      %p184 = por %p182, %p183
      %p185 = scmp.ne.s32.totalorder %s176, %s177
      %p186 = scmp.eq.s32.totalorder %s35, 0
      %p187 = por %p185, %p186
      %p188 = scmp.ne.s32.totalorder %s176, %s177
      %p189 = scmp.eq.s32.totalorder %s36, 1
      %p190 = por %p188, %p189
      %p192 = scmp.ne.s32.totalorder %s177, %s191
      %p193 = scmp.eq.s32.totalorder %s36, 0
      %p194 = por %p192, %p193
      %s196 = sadd.s32 %s195, 1
      %p199 = scmp.eq.s32.totalorder %s30, 1
      %p200 = scmp.ne.s32.totalorder %s195, %s197
      %p201 = scmp.eq.s32.totalorder %s30, 0
      %p202 = por %p200, %p201
      %p203 = scmp.ne.s32.totalorder %s195, %s197
      %p204 = scmp.eq.s32.totalorder %s35, 1
      %p205 = por %p203, %p204
      %p206 = scmp.ne.s32.totalorder %s197, %s198
      %p207 = scmp.eq.s32.totalorder %s35, 0
      %p208 = por %p206, %p207
      %p209 = scmp.ne.s32.totalorder %s197, %s198
      %p210 = scmp.eq.s32.totalorder %s36, 1
      %p211 = por %p209, %p210
      %p213 = scmp.ne.s32.totalorder %s198, %s212
      %p214 = scmp.eq.s32.totalorder %s36, 0
      %p215 = por %p213, %p214
      %s216 = ssub.s32 %s30, %s37
      %p217 = scmp.eq.s32.totalorder %s216, 0
      %s219 = sadd.s32 %s218, 1
      %s220 = scalar_select %p217, %s218, %s219
      %p223 = pneg %p217
      %p224 = scmp.eq.s32.totalorder %s30, 1
      %p225 = por %p223, %p224
      %p226 = scmp.ne.s32.totalorder %s218, %s221
      %p227 = scmp.eq.s32.totalorder %s30, 0
      %p228 = por %p226, %p227
      %p229 = scmp.ne.s32.totalorder %s218, %s221
      %p230 = scmp.eq.s32.totalorder %s35, 1
      %p231 = por %p229, %p230
      %p232 = scmp.ne.s32.totalorder %s221, %s222
      %p233 = scmp.eq.s32.totalorder %s35, 0
      %p234 = por %p232, %p233
      %p235 = scmp.ne.s32.totalorder %s221, %s222
      %p236 = scmp.eq.s32.totalorder %s36, 1
      %p237 = por %p235, %p236
      %p239 = scmp.ne.s32.totalorder %s222, %s238
      %p240 = scmp.eq.s32.totalorder %s36, 0
      %p241 = por %p239, %p240
      %s242 = ssub.s32 %s30, %s37
      %p243 = scmp.eq.s32.totalorder %s242, 0
      %s245 = sadd.s32 %s244, 1
      %s246 = scalar_select %p243, %s244, %s245
      %p249 = pneg %p243
      %p250 = scmp.eq.s32.totalorder %s30, 1
      %p251 = por %p249, %p250
      %p252 = scmp.ne.s32.totalorder %s244, %s247
      %p253 = scmp.eq.s32.totalorder %s30, 0
      %p254 = por %p252, %p253
      %p255 = scmp.ne.s32.totalorder %s244, %s247
      %p256 = scmp.eq.s32.totalorder %s35, 1
      %p257 = por %p255, %p256
      %p258 = scmp.ne.s32.totalorder %s247, %s248
      %p259 = scmp.eq.s32.totalorder %s35, 0
      %p260 = por %p258, %p259
      %p261 = scmp.ne.s32.totalorder %s247, %s248
      %p262 = scmp.eq.s32.totalorder %s36, 1
      %p263 = por %p261, %p262
      %p265 = scmp.ne.s32.totalorder %s248, %s264
      %p266 = scmp.eq.s32.totalorder %s36, 0
      %p267 = por %p265, %p266
      %p268 = scmp.le.s32.totalorder 1, %s30
      %p269 = scmp.lt.s32.totalorder %s30, 3
      %p270 = pnand %p268, %p269
      %p271 = pneg %p270
      // Predicated region
      $region9: #{tpu_custom_call.1} parent=5 // pred_check
        _
      $region10: #{tpu_custom_call.1} parent=5 // pred_check_branch
        %273 = sbr.rel (%p270) target = $region12
      $region11: #{tpu_custom_call.1} parent=5 // pred_region
        %s274 = ssub.s32 %s30, 1
        // Predicated region
        $region13: #{tpu_custom_call.1} parent=11 // pred_check
          %p275 = pneg %p103
        $region14: #{tpu_custom_call.1} parent=11 // pred_check_branch
          %277 = sbr.rel (%p275) target = $region16
        $region15: #{tpu_custom_call.1} parent=11 // pred_region
          %s279 = ssub.s32 1024, 1024
          %280 = vsyncadd [#allocation6], %s279
          %s281 = sshll.u32 [#allocation7], 4
          %s282 = int_to_ptr.vmem [resolvable:$true] %s281
          %287 = dma.hbm_to_vmem [thread:$0]  %s2, 1024, %s282, [#allocation6], 64, 64, 4
        $region16: #{tpu_custom_call.1} parent=11 // pred_fallthru
          _
        // Predicated region
        $region17: #{tpu_custom_call.1} parent=11 // pred_check
          %p288 = pneg %p124
        $region18: #{tpu_custom_call.1} parent=11 // pred_check_branch
          %290 = sbr.rel (%p288) target = $region20
        $region19: #{tpu_custom_call.1} parent=11 // pred_region
          _
        $region20: #{tpu_custom_call.1} parent=11 // pred_fallthru
          _
        // Predicated region
        $region21: #{tpu_custom_call.1} parent=11 // pred_check
          %p291 = pneg %p145
        $region22: #{tpu_custom_call.1} parent=11 // pred_check_branch
          %293 = sbr.rel (%p291) target = $region24
        $region23: #{tpu_custom_call.1} parent=11 // pred_region
          %s295 = ssub.s32 2048, 2048
          %296 = vsyncadd [#allocation9], %s295
          %s297 = sshll.u32 [#allocation8], 4
          %s298 = int_to_ptr.vmem [resolvable:$true] %s297
          %303 = dma.hbm_to_vmem [thread:$0]  %s4, 2048, %s298, [#allocation9], 128, 128, 8
        $region24: #{tpu_custom_call.1} parent=11 // pred_fallthru
          _
        // Predicated region
        $region25: #{tpu_custom_call.1} parent=11 // pred_check
          %p304 = pneg %p166
        $region26: #{tpu_custom_call.1} parent=11 // pred_check_branch
          %306 = sbr.rel (%p304) target = $region28
        $region27: #{tpu_custom_call.1} parent=11 // pred_region
          %s308 = ssub.s32 1024, 1024
          %309 = vsyncadd [#allocation9], %s308
          %s310 = sshll.u32 [#allocation10], 4
          %s311 = int_to_ptr.vmem [resolvable:$true] %s310
          %316 = dma.hbm_to_vmem [thread:$0]  %s5, 1024, %s311, [#allocation9], 64, 64, 4
        $region28: #{tpu_custom_call.1} parent=11 // pred_fallthru
          _
        // Predicated region
        $region29: #{tpu_custom_call.1} parent=11 // pred_check
          %p317 = pneg %p187
        $region30: #{tpu_custom_call.1} parent=11 // pred_check_branch
          %319 = sbr.rel (%p317) target = $region32
        $region31: #{tpu_custom_call.1} parent=11 // pred_region
          %s321 = ssub.s32 1024, 1024
          %322 = vsyncadd [#allocation12], %s321
          %s323 = sshll.u32 [#allocation11], 4
          %s324 = int_to_ptr.vmem [resolvable:$true] %s323
          %329 = dma.hbm_to_vmem [thread:$0]  %s6, 1024, %s324, [#allocation12], 64, 64, 4
        $region32: #{tpu_custom_call.1} parent=11 // pred_fallthru
          _
        // Predicated region
        $region33: #{tpu_custom_call.1} parent=11 // pred_check
          %p330 = pneg %p208
        $region34: #{tpu_custom_call.1} parent=11 // pred_check_branch
          %332 = sbr.rel (%p330) target = $region36
        $region35: #{tpu_custom_call.1} parent=11 // pred_region
          _
        $region36: #{tpu_custom_call.1} parent=11 // pred_fallthru
          _
      $region12: #{tpu_custom_call.1} parent=5 // pred_fallthru
        _
      %p333 = scmp.lt.s32.totalorder %s30, 2
      // Predicated region
      $region37: #{tpu_custom_call.1} parent=5 // pred_check
        %p334 = pneg %p333
      $region38: #{tpu_custom_call.1} parent=5 // pred_check_branch
        %336 = sbr.rel (%p334) target = $region40
      $region39: #{tpu_custom_call.1} parent=5 // pred_region
        // Predicated region
        $region41: #{tpu_custom_call.1} parent=39 // pred_check
          %p337 = pneg %p50
        $region42: #{tpu_custom_call.1} parent=39 // pred_check_branch
          %339 = sbr.rel (%p337) target = $region44
        $region43: #{tpu_custom_call.1} parent=39 // pred_region
          %s340 = sand.u32 %s40, 1
          %s341 = scalar_lea.sflag [#allocation3], %s340
          %s342 = sand.u32 %s40, 1
          %s343 = smul.addr %s342, 32
          %s344 = scalar_lea.vmem [#allocation2], %s343
          %s346 = ssub.s32 512, 512
          %347 = vsyncadd %s341, %s346
          %s348 = smul.addr %s30, 8
          %s349 = smul.addr %s348, 64
          %s350 = scalar_lea.hbm %s0, %s349
          %s351 = sshll.u32 %s344, 4
          %s352 = int_to_ptr.vmem [resolvable:$true] %s351
          %357 = dma.hbm_to_vmem [thread:$0]  %s350, 512, %s352, %s341, 64, 64, 4
        $region44: #{tpu_custom_call.1} parent=39 // pred_fallthru
          _
        // Predicated region
        $region45: #{tpu_custom_call.1} parent=39 // pred_check
          %p358 = pneg %p76
        $region46: #{tpu_custom_call.1} parent=39 // pred_check_branch
          %360 = sbr.rel (%p358) target = $region48
        $region47: #{tpu_custom_call.1} parent=39 // pred_region
          %s361 = sand.u32 %s30, 1
          %s362 = scalar_lea.sflag [#allocation6], %s361
          %s363 = sand.u32 %s66, 1
          %s364 = smul.addr %s363, 128
          %s365 = scalar_lea.vmem [#allocation5], %s364
          %s367 = ssub.s32 2048, 2048
          %368 = vsyncadd %s362, %s367
          %s369 = smul.addr %s30, 32
          %s370 = smul.addr %s369, 64
          %s371 = scalar_lea.hbm %s1, %s370
          %s372 = sshll.u32 %s365, 4
          %s373 = int_to_ptr.vmem [resolvable:$true] %s372
          %378 = dma.hbm_to_vmem [thread:$0]  %s371, 2048, %s373, %s362, 64, 64, 4
        $region48: #{tpu_custom_call.1} parent=39 // pred_fallthru
          _
      $region40: #{tpu_custom_call.1} parent=5 // pred_fallthru
        _
      %p379 = scmp.le.s32.totalorder 1, %s30
      %p380 = scmp.lt.s32.totalorder %s30, 3
      %p381 = pnand %p379, %p380
      %p382 = pneg %p381
      // Predicated region
      $region49: #{tpu_custom_call.1} parent=5 // pred_check
        _
      $region50: #{tpu_custom_call.1} parent=5 // pred_check_branch
        %384 = sbr.rel (%p381) target = $region52
      $region51: #{tpu_custom_call.1} parent=5 // pred_region
        %s385 = ssub.s32 %s30, 1
        %s386 = sand.u32 %s43, 1
        %s387 = scalar_lea.sflag [#allocation3], %s386
        %s388 = sand.u32 %s43, 1
        %s389 = smul.addr %s388, 32
        %s390 = scalar_lea.vmem [#allocation2], %s389
        // Predicated region
        $region53: #{tpu_custom_call.1} parent=51 // pred_check
          %p391 = pneg %p56
        $region54: #{tpu_custom_call.1} parent=51 // pred_check_branch
          %393 = sbr.rel (%p391) target = $region56
        $region55: #{tpu_custom_call.1} parent=51 // pred_region
          %394 = dma.done %s387, 512
        $region56: #{tpu_custom_call.1} parent=51 // pred_fallthru
          _
        %s395 = sand.u32 %s35, 1
        %s396 = scalar_lea.sflag [#allocation6], %s395
        %s397 = sand.u32 %s69, 1
        %s398 = smul.addr %s397, 128
        %s399 = scalar_lea.vmem [#allocation5], %s398
        // Predicated region
        $region57: #{tpu_custom_call.1} parent=51 // pred_check
          %p400 = pneg %p82
        $region58: #{tpu_custom_call.1} parent=51 // pred_check_branch
          %402 = sbr.rel (%p400) target = $region60
        $region59: #{tpu_custom_call.1} parent=51 // pred_region
          %403 = dma.done %s396, 2048
        $region60: #{tpu_custom_call.1} parent=51 // pred_fallthru
          _
        // Predicated region
        $region61: #{tpu_custom_call.1} parent=51 // pred_check
          %p404 = pneg %p103
        $region62: #{tpu_custom_call.1} parent=51 // pred_check_branch
          %406 = sbr.rel (%p404) target = $region64
        $region63: #{tpu_custom_call.1} parent=51 // pred_region
          %407 = dma.done [#allocation6], 1024
        $region64: #{tpu_custom_call.1} parent=51 // pred_fallthru
          _
        // Predicated region
        $region65: #{tpu_custom_call.1} parent=51 // pred_check
          %p408 = pneg %p145
        $region66: #{tpu_custom_call.1} parent=51 // pred_check_branch
          %410 = sbr.rel (%p408) target = $region68
        $region67: #{tpu_custom_call.1} parent=51 // pred_region
          %411 = dma.done [#allocation9], 2048
        $region68: #{tpu_custom_call.1} parent=51 // pred_fallthru
          _
        // Predicated region
        $region69: #{tpu_custom_call.1} parent=51 // pred_check
          %p412 = pneg %p166
        $region70: #{tpu_custom_call.1} parent=51 // pred_check_branch
          %414 = sbr.rel (%p412) target = $region72
        $region71: #{tpu_custom_call.1} parent=51 // pred_region
          %415 = dma.done [#allocation9], 1024
        $region72: #{tpu_custom_call.1} parent=51 // pred_fallthru
          _
        // Predicated region
        $region73: #{tpu_custom_call.1} parent=51 // pred_check
          %p416 = pneg %p187
        $region74: #{tpu_custom_call.1} parent=51 // pred_check_branch
          %418 = sbr.rel (%p416) target = $region76
        $region75: #{tpu_custom_call.1} parent=51 // pred_region
          %419 = dma.done [#allocation12], 1024
        $region76: #{tpu_custom_call.1} parent=51 // pred_fallthru
          _
        %s420 = sand.u32 %s43, 1
        %s421 = scalar_lea.sflag [#allocation3], %s420
        %s422 = sand.u32 %s43, 1
        %s423 = smul.addr %s422, 32
        %s424 = scalar_lea.vmem [#allocation2], %s423
        %p425 = pneg %p56
        %p426 = pneg %p53
        %s427 = sand.u32 %s35, 1
        %s428 = scalar_lea.sflag [#allocation6], %s427
        %s429 = sand.u32 %s69, 1
        %s430 = smul.addr %s429, 128
        %s431 = scalar_lea.vmem [#allocation5], %s430
        %p432 = pneg %p82
        %p433 = pneg %p79
        %p434 = pneg %p103
        %p435 = pneg %p100
        %p436 = pneg %p124
        %p437 = pneg %p121
        %p438 = pneg %p145
        %p439 = pneg %p142
        %p440 = pneg %p166
        %p441 = pneg %p163
        %p442 = pneg %p187
        %p443 = pneg %p184
        %p444 = pneg %p208
        %p445 = pneg %p205
        %p446 = pneg %p234
        %p447 = pneg %p231
        %s448 = sand.u32 %s221, 1
        %s449 = scalar_lea.sflag [#allocation4], %s448
        %s450 = sand.u32 %s221, 1
        %s451 = smul.addr %s450, 64
        %s452 = scalar_lea.vmem [#allocation13], %s451
        %p453 = pneg %p260
        %p454 = pneg %p257
        %s455 = sand.u32 %s247, 1
        %s456 = scalar_lea.sflag [#allocation15], %s455
        %s457 = sand.u32 %s247, 1
        %s458 = smul.addr %s457, 256
        %s459 = scalar_lea.vmem [#allocation14], %s458
        %v461 = vld [vmem:[%s390] sm:$0xf]
        %v462 = vld [vmem:[%s390 + $0x4] sm:$0xf]
        %v463 = vld [vmem:[%s390 + $0x8] sm:$0xf]
        %v464 = vld [vmem:[%s390 + $0xc] sm:$0xf]
        %v465 = vld [vmem:[%s390 + $0x10] sm:$0xf]
        %v466 = vld [vmem:[%s390 + $0x14] sm:$0xf]
        %v467 = vld [vmem:[%s390 + $0x18] sm:$0xf]
        %v468 = vld [vmem:[%s390 + $0x1c] sm:$0xf]
        %v469 = vld [vmem:[%s399] sm:$0xf]
        %v470 = vld [vmem:[%s399 + $0x4] sm:$0xf]
        %v471 = vld [vmem:[%s399 + $0x8] sm:$0xf]
        %v472 = vld [vmem:[%s399 + $0xc] sm:$0xf]
        %v473 = vld [vmem:[%s399 + $0x10] sm:$0xf]
        %v474 = vld [vmem:[%s399 + $0x14] sm:$0xf]
        %v475 = vld [vmem:[%s399 + $0x18] sm:$0xf]
        %v476 = vld [vmem:[%s399 + $0x1c] sm:$0xf]
        %v477 = vld [vmem:[%s399 + $0x20] sm:$0xf]
        %v478 = vld [vmem:[%s399 + $0x24] sm:$0xf]
        %v479 = vld [vmem:[%s399 + $0x28] sm:$0xf]
        %v480 = vld [vmem:[%s399 + $0x2c] sm:$0xf]
        %v481 = vld [vmem:[%s399 + $0x30] sm:$0xf]
        %v482 = vld [vmem:[%s399 + $0x34] sm:$0xf]
        %v483 = vld [vmem:[%s399 + $0x38] sm:$0xf]
        %v484 = vld [vmem:[%s399 + $0x3c] sm:$0xf]
        %v485 = vld [vmem:[%s399 + $0x40] sm:$0xf]
        %v486 = vld [vmem:[%s399 + $0x44] sm:$0xf]
        %v487 = vld [vmem:[%s399 + $0x48] sm:$0xf]
        %v488 = vld [vmem:[%s399 + $0x4c] sm:$0xf]
        %v489 = vld [vmem:[%s399 + $0x50] sm:$0xf]
        %v490 = vld [vmem:[%s399 + $0x54] sm:$0xf]
        %v491 = vld [vmem:[%s399 + $0x58] sm:$0xf]
        %v492 = vld [vmem:[%s399 + $0x5c] sm:$0xf]
        %v493 = vld [vmem:[%s399 + $0x60] sm:$0xf]
        %v494 = vld [vmem:[%s399 + $0x64] sm:$0xf]
        %v495 = vld [vmem:[%s399 + $0x68] sm:$0xf]
        %v496 = vld [vmem:[%s399 + $0x6c] sm:$0xf]
        %v497 = vld [vmem:[%s399 + $0x70] sm:$0xf]
        %v498 = vld [vmem:[%s399 + $0x74] sm:$0xf]
        %v499 = vld [vmem:[%s399 + $0x78] sm:$0xf]
        %v500 = vld [vmem:[%s399 + $0x7c] sm:$0xf]
        %v501 = vld [vmem:[#allocation7] sm:$0xf]
        %v502 = vld [vmem:[#allocation7 + $0x4] sm:$0xf]
        %v503 = vld [vmem:[#allocation7 + $0x8] sm:$0xf]
        %v504 = vld [vmem:[#allocation7 + $0xc] sm:$0xf]
        %v505 = vld [vmem:[#allocation7 + $0x10] sm:$0xf]
        %v506 = vld [vmem:[#allocation7 + $0x14] sm:$0xf]
        %v507 = vld [vmem:[#allocation7 + $0x18] sm:$0xf]
        %v508 = vld [vmem:[#allocation7 + $0x1c] sm:$0xf]
        %v509 = vld [vmem:[#allocation7 + $0x20] sm:$0xf]
        %v510 = vld [vmem:[#allocation7 + $0x24] sm:$0xf]
        %v511 = vld [vmem:[#allocation7 + $0x28] sm:$0xf]
        %v512 = vld [vmem:[#allocation7 + $0x2c] sm:$0xf]
        %v513 = vld [vmem:[#allocation7 + $0x30] sm:$0xf]
        %v514 = vld [vmem:[#allocation7 + $0x34] sm:$0xf]
        %v515 = vld [vmem:[#allocation7 + $0x38] sm:$0xf]
        %v516 = vld [vmem:[#allocation7 + $0x3c] sm:$0xf]
        %v517 = vld [vmem:[%s3] sm:$0x1]
        %v519 = vlaneseq
        %v520 = vshrl.u32 %v519, 7
        %v521 = vsub.s32 0, %v520
        %v522 = vrot.slane %v517, %v521
        %v532 = vunpack.c.l.b16 %v461
        %v533 = vunpack.c.l.b16 %v462
        %v534 = vunpack.c.l.b16 %v463
        %v535 = vunpack.c.l.b16 %v464
        %v536 = vunpack.c.l.b16 %v465
        %v537 = vunpack.c.l.b16 %v466
        %v538 = vunpack.c.l.b16 %v467
        %v539 = vunpack.c.l.b16 %v468
        %v540 = vpack.c.b16 %v533, %v532
        %v541 = vpack.c.b16 %v535, %v534
        %v542 = vpack.c.b16 %v537, %v536
        %v543 = vpack.c.b16 %v539, %v538
        %v564 = vunpack.c.l.b16 %v501
        %v565 = vunpack.c.l.b16 %v502
        %v566 = vunpack.c.l.b16 %v503
        %v567 = vunpack.c.l.b16 %v504
        %v568 = vunpack.c.l.b16 %v505
        %v569 = vunpack.c.l.b16 %v506
        %v570 = vunpack.c.l.b16 %v507
        %v571 = vunpack.c.l.b16 %v508
        %v572 = vunpack.c.l.b16 %v509
        %v573 = vunpack.c.l.b16 %v510
        %v574 = vunpack.c.l.b16 %v511
        %v575 = vunpack.c.l.b16 %v512
        %v576 = vunpack.c.l.b16 %v513
        %v577 = vunpack.c.l.b16 %v514
        %v578 = vunpack.c.l.b16 %v515
        %v579 = vunpack.c.l.b16 %v516
        %v580 = vpack.c.b16 %v565, %v564
        %v581 = vpack.c.b16 %v567, %v566
        %v582 = vpack.c.b16 %v569, %v568
        %v583 = vpack.c.b16 %v571, %v570
        %v584 = vpack.c.b16 %v573, %v572
        %v585 = vpack.c.b16 %v575, %v574
        %v586 = vpack.c.b16 %v577, %v576
        %v587 = vpack.c.b16 %v579, %v578
        %596 = vmatprep.subr.bf16.mxu0 0
        %597 = vmatpush1.bf16.msra.mxu0 %v580
        %598 = vmatprep.subr.bf16.mxu0 0
        %599 = vmatpush1.bf16.msra.mxu0 %v581
        %600 = vmatprep.subr.bf16.mxu0 0
        %601 = vmatpush1.bf16.msra.mxu0 %v582
        %602 = vmatprep.subr.bf16.mxu0 0
        %603 = vmatpush1.bf16.msra.mxu0 %v583
        %604 = vmatprep.subr.bf16.mxu0 0
        %605 = vmatpush1.bf16.msra.mxu0 %v584
        %606 = vmatprep.subr.bf16.mxu0 0
        %607 = vmatpush1.bf16.msra.mxu0 %v585
        %608 = vmatprep.subr.bf16.mxu0 0
        %609 = vmatpush1.bf16.msra.mxu0 %v586
        %610 = vmatprep.subr.bf16.mxu0 0
        %611 = vmatpush1.bf16.msra.mxu0 %v587
        %612 = vmatprep.subr.bf16.mxu0 0
        %613 = vmatpush1.bf16.msra.mxu0 0
        %614 = vmatprep.subr.bf16.mxu0 0
        %615 = vmatpush1.bf16.msra.mxu0 0
        %616 = vmatprep.subr.bf16.mxu0 0
        %617 = vmatpush1.bf16.msra.mxu0 0
        %618 = vmatprep.subr.bf16.mxu0 0
        %619 = vmatpush1.bf16.msra.mxu0 0
        %620 = vmatprep.subr.bf16.mxu0 0
        %621 = vmatpush1.bf16.msra.mxu0 0
        %622 = vmatprep.subr.bf16.mxu0 0
        %623 = vmatpush1.bf16.msra.mxu0 0
        %624 = vmatprep.subr.bf16.mxu0 0
        %625 = vmatpush1.bf16.msra.mxu0 0
        %626 = vmatprep.subr.bf16.mxu0 0
        %627 = vmatpush1.bf16.msra.mxu0 0
        %628 = vmatprep.mubr.bf16.mxu0 0
        %629 = vmatmul.mubr.bf16.gmra.mrb[0].mxu0 %v540
        %v630 = vpop.f32.mrb[0].mxu0
        %v631 = vadd.f32 %v522, %v630
        %v632 = vpop.f32.mrb[0].mxu0
        %v633 = vpop.f32.mrb[0].mxu0
        %v634 = vadd.f32 %v522, %v633
        %v635 = vpop.f32.mrb[0].mxu0
        %636 = vmatprep.mubr.bf16.mxu0 0
        %637 = vmatmul.mubr.bf16.gmra.mrb[0].mxu0 %v541
        %v638 = vpop.f32.mrb[0].mxu0
        %v639 = vadd.f32 %v522, %v638
        %v640 = vpop.f32.mrb[0].mxu0
        %v641 = vpop.f32.mrb[0].mxu0
        %v642 = vadd.f32 %v522, %v641
        %v643 = vpop.f32.mrb[0].mxu0
        %644 = vmatprep.mubr.bf16.mxu0 0
        %645 = vmatmul.mubr.bf16.gmra.mrb[0].mxu0 %v542
        %v646 = vpop.f32.mrb[0].mxu0
        %v647 = vadd.f32 %v522, %v646
        %v648 = vpop.f32.mrb[0].mxu0
        %v649 = vpop.f32.mrb[0].mxu0
        %v650 = vadd.f32 %v522, %v649
        %v651 = vpop.f32.mrb[0].mxu0
        %652 = vmatprep.mubr.bf16.mxu0 0
        %653 = vmatmul.mubr.bf16.gmra.mrb[0].mxu0 %v543
        %v654 = vpop.f32.mrb[0].mxu0
        %v655 = vadd.f32 %v522, %v654
        %v656 = vpop.f32.mrb[0].mxu0
        %v657 = vpop.f32.mrb[0].mxu0
        %v658 = vadd.f32 %v522, %v657
        %v659 = vpop.f32.mrb[0].mxu0
        %660 = vdwg.mxu0
        %v661 = vmax.f32 %v631, 0.0
        %v662 = vmax.f32 %v634, 0.0
        %v663 = vmax.f32 %v639, 0.0
        %v664 = vmax.f32 %v642, 0.0
        %v665 = vmax.f32 %v647, 0.0
        %v666 = vmax.f32 %v650, 0.0
        %v667 = vmax.f32 %v655, 0.0
        %v668 = vmax.f32 %v658, 0.0
        %v669 = vunpack.c.l.bf16 %v461
        %v670 = vunpack.c.l.bf16 %v462
        %v671 = vunpack.c.l.bf16 %v463
        %v672 = vunpack.c.l.bf16 %v464
        %v673 = vunpack.c.l.bf16 %v465
        %v674 = vunpack.c.l.bf16 %v466
        %v675 = vunpack.c.l.bf16 %v467
        %v676 = vunpack.c.l.bf16 %v468
        %v677 = vadd.f32 %v669, %v670
        %v678 = vadd.f32 %v677, %v671
        %v679 = vadd.f32 %v678, %v672
        %v680 = vadd.f32 %v679, %v673
        %v681 = vadd.f32 %v680, %v674
        %v682 = vadd.f32 %v681, %v675
        %v683 = vadd.f32 %v682, %v676
        %v684 = vrot.slane %v683, 4
        %v685 = vadd.f32 %v683, %v684
        %v686 = vrot.slane %v685, 2
        %v687 = vadd.f32 %v685, %v686
        %v688 = vrot.slane %v687, 1
        %v689 = vadd.f32 %v687, %v688
        %v690 = vmul.f32 %v689, 0.015625
        %v691 = vld [vmem:[#allocation8] sm:$0xff]
        %v692 = vld [vmem:[#allocation8 + $0x8] sm:$0xff]
        %v693 = vld [vmem:[#allocation8 + $0x10] sm:$0xff]
        %v694 = vld [vmem:[#allocation8 + $0x18] sm:$0xff]
        %v695 = vld [vmem:[#allocation8 + $0x20] sm:$0xff]
        %v696 = vld [vmem:[#allocation8 + $0x28] sm:$0xff]
        %v697 = vld [vmem:[#allocation8 + $0x30] sm:$0xff]
        %v698 = vld [vmem:[#allocation8 + $0x38] sm:$0xff]
        %v699 = vld [vmem:[#allocation8 + $0x40] sm:$0xff]
        %v700 = vld [vmem:[#allocation8 + $0x48] sm:$0xff]
        %v701 = vld [vmem:[#allocation8 + $0x50] sm:$0xff]
        %v702 = vld [vmem:[#allocation8 + $0x58] sm:$0xff]
        %v703 = vld [vmem:[#allocation8 + $0x60] sm:$0xff]
        %v704 = vld [vmem:[#allocation8 + $0x68] sm:$0xff]
        %v705 = vld [vmem:[#allocation8 + $0x70] sm:$0xff]
        %v706 = vld [vmem:[#allocation8 + $0x78] sm:$0xff]
        %707 = vmatprep.subr.mxu0 0.0
        %708 = vmatpush1.msra.mxu0 %v691
        %709 = vmatprep.subr.mxu0 0.0
        %710 = vmatpush1.msra.mxu0 %v692
        %711 = vmatprep.subr.mxu0 0.0
        %712 = vmatpush1.msra.mxu0 %v693
        %713 = vmatprep.subr.mxu0 0.0
        %714 = vmatpush1.msra.mxu0 %v694
        %715 = vmatprep.subr.mxu0 0.0
        %716 = vmatpush1.msra.mxu0 %v695
        %717 = vmatprep.subr.mxu0 0.0
        %718 = vmatpush1.msra.mxu0 %v696
        %719 = vmatprep.subr.mxu0 0.0
        %720 = vmatpush1.msra.mxu0 %v697
        %721 = vmatprep.subr.mxu0 0.0
        %722 = vmatpush1.msra.mxu0 %v698
        %723 = vmatprep.subr.mxu0 0.0
        %724 = vmatpush1.msra.mxu0 %v699
        %725 = vmatprep.subr.mxu0 0.0
        %726 = vmatpush1.msra.mxu0 %v700
        %727 = vmatprep.subr.mxu0 0.0
        %728 = vmatpush1.msra.mxu0 %v701
        %729 = vmatprep.subr.mxu0 0.0
        %730 = vmatpush1.msra.mxu0 %v702
        %731 = vmatprep.subr.mxu0 0.0
        %732 = vmatpush1.msra.mxu0 %v703
        %733 = vmatprep.subr.mxu0 0.0
        %734 = vmatpush1.msra.mxu0 %v704
        %735 = vmatprep.subr.mxu0 0.0
        %736 = vmatpush1.msra.mxu0 %v705
        %737 = vmatprep.subr.mxu0 0.0
        %738 = vmatpush1.msra.mxu0 %v706
        %739 = vmatprep.subr.mxu0 0.0
        %740 = vmatpush1.msra.mxu0 0.0
        %741 = vmatprep.subr.mxu0 0.0
        %742 = vmatpush1.msra.mxu0 0.0
        %743 = vmatprep.subr.mxu0 0.0
        %744 = vmatpush1.msra.mxu0 0.0
        %745 = vmatprep.subr.mxu0 0.0
        %746 = vmatpush1.msra.mxu0 0.0
        %747 = vmatprep.subr.mxu0 0.0
        %748 = vmatpush1.msra.mxu0 0.0
        %749 = vmatprep.subr.mxu0 0.0
        %750 = vmatpush1.msra.mxu0 0.0
        %751 = vmatprep.subr.mxu0 0.0
        %752 = vmatpush1.msra.mxu0 0.0
        %753 = vmatprep.subr.mxu0 0.0
        %754 = vmatpush1.msra.mxu0 0.0
        %755 = vmatprep.subr.mxu0 0.0
        %756 = vmatpush1.msra.mxu0 0.0
        %757 = vmatprep.subr.mxu0 0.0
        %758 = vmatpush1.msra.mxu0 0.0
        %759 = vmatprep.subr.mxu0 0.0
        %760 = vmatpush1.msra.mxu0 0.0
        %761 = vmatprep.subr.mxu0 0.0
        %762 = vmatpush1.msra.mxu0 0.0
        %763 = vmatprep.subr.mxu0 0.0
        %764 = vmatpush1.msra.mxu0 0.0
        %765 = vmatprep.subr.mxu0 0.0
        %766 = vmatpush1.msra.mxu0 0.0
        %767 = vmatprep.subr.mxu0 0.0
        %768 = vmatpush1.msra.mxu0 0.0
        %769 = vmatprep.subr.mxu0 0.0
        %770 = vmatpush1.msra.mxu0 0.0
        %771 = vmatprep.mubr.f32.mxu0 0.0
        %772 = vmatmul.mubr.f32.gmra.mrb[0].mxu0 %v690
        %v773 = vpop.f32.mrb[0].mxu0
        %v774 = vadd.f32 0.0, %v773
        %v775 = vpop.f32.mrb[0].mxu0
        %776 = vdwg.mxu0
        %v777 = vxor.u32 %v774, 2147483648
        %v778 = vmul.f32 %v777, 1.442695
        %v779 = vpow.pop %v778
        %v780 = vadd.f32 %v779, 1.0
        %v781 = vrcp.pop %v780
        %v782 = vmul.f32 1.0, %v781
        %v783 = vlaneseq
        %v784 = vshrl.u32 %v783, 7
        %v785 = vsub.s32 0, %v784
        %v786 = vrot.slane %v782, %v785
        %v787 = vmul.f32 %v661, %v786
        %v788 = vmul.f32 %v662, %v786
        %v789 = vmul.f32 %v663, %v786
        %v790 = vmul.f32 %v664, %v786
        %v791 = vmul.f32 %v665, %v786
        %v792 = vmul.f32 %v666, %v786
        %v793 = vmul.f32 %v667, %v786
        %v794 = vmul.f32 %v668, %v786
        %v795 = vpack.c.bf16 %v788, %v787
        %v796 = vpack.c.bf16 %v790, %v789
        %v797 = vpack.c.bf16 %v792, %v791
        %v798 = vpack.c.bf16 %v794, %v793
        %v799 = vld [vmem:[#allocation10] sm:$0xf]
        %v800 = vld [vmem:[#allocation10 + $0x4] sm:$0xf]
        %v801 = vld [vmem:[#allocation10 + $0x8] sm:$0xf]
        %v802 = vld [vmem:[#allocation10 + $0xc] sm:$0xf]
        %v803 = vld [vmem:[#allocation10 + $0x10] sm:$0xf]
        %v804 = vld [vmem:[#allocation10 + $0x14] sm:$0xf]
        %v805 = vld [vmem:[#allocation10 + $0x18] sm:$0xf]
        %v806 = vld [vmem:[#allocation10 + $0x1c] sm:$0xf]
        %v807 = vld [vmem:[#allocation10 + $0x20] sm:$0xf]
        %v808 = vld [vmem:[#allocation10 + $0x24] sm:$0xf]
        %v809 = vld [vmem:[#allocation10 + $0x28] sm:$0xf]
        %v810 = vld [vmem:[#allocation10 + $0x2c] sm:$0xf]
        %v811 = vld [vmem:[#allocation10 + $0x30] sm:$0xf]
        %v812 = vld [vmem:[#allocation10 + $0x34] sm:$0xf]
        %v813 = vld [vmem:[#allocation10 + $0x38] sm:$0xf]
        %v814 = vld [vmem:[#allocation10 + $0x3c] sm:$0xf]
        %v831 = vunpack.c.l.b16 %v799
        %v832 = vunpack.c.l.b16 %v800
        %v833 = vunpack.c.l.b16 %v801
        %v834 = vunpack.c.l.b16 %v802
        %v835 = vunpack.c.l.b16 %v803
        %v836 = vunpack.c.l.b16 %v804
        %v837 = vunpack.c.l.b16 %v805
        %v838 = vunpack.c.l.b16 %v806
        %v839 = vunpack.c.l.b16 %v807
        %v840 = vunpack.c.l.b16 %v808
        %v841 = vunpack.c.l.b16 %v809
        %v842 = vunpack.c.l.b16 %v810
        %v843 = vunpack.c.l.b16 %v811
        %v844 = vunpack.c.l.b16 %v812
        %v845 = vunpack.c.l.b16 %v813
        %v846 = vunpack.c.l.b16 %v814
        %v847 = vpack.c.b16 %v832, %v831
        %v848 = vpack.c.b16 %v834, %v833
        %v849 = vpack.c.b16 %v836, %v835
        %v850 = vpack.c.b16 %v838, %v837
        %v851 = vpack.c.b16 %v840, %v839
        %v852 = vpack.c.b16 %v842, %v841
        %v853 = vpack.c.b16 %v844, %v843
        %v854 = vpack.c.b16 %v846, %v845
        %863 = vmatprep.subr.bf16.mxu0 0
        %864 = vmatpush1.bf16.msra.mxu0 %v847
        %865 = vmatprep.subr.bf16.mxu0 0
        %866 = vmatpush1.bf16.msra.mxu0 %v848
        %867 = vmatprep.subr.bf16.mxu0 0
        %868 = vmatpush1.bf16.msra.mxu0 %v849
        %869 = vmatprep.subr.bf16.mxu0 0
        %870 = vmatpush1.bf16.msra.mxu0 %v850
        %871 = vmatprep.subr.bf16.mxu0 0
        %872 = vmatpush1.bf16.msra.mxu0 %v851
        %873 = vmatprep.subr.bf16.mxu0 0
        %874 = vmatpush1.bf16.msra.mxu0 %v852
        %875 = vmatprep.subr.bf16.mxu0 0
        %876 = vmatpush1.bf16.msra.mxu0 %v853
        %877 = vmatprep.subr.bf16.mxu0 0
        %878 = vmatpush1.bf16.msra.mxu0 %v854
        %879 = vmatprep.subr.bf16.mxu0 0
        %880 = vmatpush1.bf16.msra.mxu0 0
        %881 = vmatprep.subr.bf16.mxu0 0
        %882 = vmatpush1.bf16.msra.mxu0 0
        %883 = vmatprep.subr.bf16.mxu0 0
        %884 = vmatpush1.bf16.msra.mxu0 0
        %885 = vmatprep.subr.bf16.mxu0 0
        %886 = vmatpush1.bf16.msra.mxu0 0
        %887 = vmatprep.subr.bf16.mxu0 0
        %888 = vmatpush1.bf16.msra.mxu0 0
        %889 = vmatprep.subr.bf16.mxu0 0
        %890 = vmatpush1.bf16.msra.mxu0 0
        %891 = vmatprep.subr.bf16.mxu0 0
        %892 = vmatpush1.bf16.msra.mxu0 0
        %893 = vmatprep.subr.bf16.mxu0 0
        %894 = vmatpush1.bf16.msra.mxu0 0
        %895 = vmatprep.mubr.bf16.mxu0 0
        %896 = vmatmul.mubr.bf16.gmra.mrb[0].mxu0 %v795
        %v897 = vpop.f32.mrb[0].mxu0
        %v898 = vadd.f32 0.0, %v897
        %v899 = vpop.f32.mrb[0].mxu0
        %v900 = vpop.f32.mrb[0].mxu0
        %v901 = vadd.f32 0.0, %v900
        %v902 = vpop.f32.mrb[0].mxu0
        %903 = vmatprep.mubr.bf16.mxu0 0
        %904 = vmatmul.mubr.bf16.gmra.mrb[0].mxu0 %v796
        %v905 = vpop.f32.mrb[0].mxu0
        %v906 = vadd.f32 0.0, %v905
        %v907 = vpop.f32.mrb[0].mxu0
        %v908 = vpop.f32.mrb[0].mxu0
        %v909 = vadd.f32 0.0, %v908
        %v910 = vpop.f32.mrb[0].mxu0
        %911 = vmatprep.mubr.bf16.mxu0 0
        %912 = vmatmul.mubr.bf16.gmra.mrb[0].mxu0 %v797
        %v913 = vpop.f32.mrb[0].mxu0
        %v914 = vadd.f32 0.0, %v913
        %v915 = vpop.f32.mrb[0].mxu0
        %v916 = vpop.f32.mrb[0].mxu0
        %v917 = vadd.f32 0.0, %v916
        %v918 = vpop.f32.mrb[0].mxu0
        %919 = vmatprep.mubr.bf16.mxu0 0
        %920 = vmatmul.mubr.bf16.gmra.mrb[0].mxu0 %v798
        %v921 = vpop.f32.mrb[0].mxu0
        %v922 = vadd.f32 0.0, %v921
        %v923 = vpop.f32.mrb[0].mxu0
        %v924 = vpop.f32.mrb[0].mxu0
        %v925 = vadd.f32 0.0, %v924
        %v926 = vpop.f32.mrb[0].mxu0
        %927 = vdwg.mxu0
        %928 = vst [vmem:[%s452] sm:$0xff] %v898
        %929 = vst [vmem:[%s452 + $0x8] sm:$0xff] %v901
        %930 = vst [vmem:[%s452 + $0x10] sm:$0xff] %v906
        %931 = vst [vmem:[%s452 + $0x18] sm:$0xff] %v909
        %932 = vst [vmem:[%s452 + $0x20] sm:$0xff] %v914
        %933 = vst [vmem:[%s452 + $0x28] sm:$0xff] %v917
        %934 = vst [vmem:[%s452 + $0x30] sm:$0xff] %v922
        %935 = vst [vmem:[%s452 + $0x38] sm:$0xff] %v925
        %v936 = vld [vmem:[#allocation11] sm:$0xf]
        %v937 = vld [vmem:[#allocation11 + $0x4] sm:$0xf]
        %v938 = vld [vmem:[#allocation11 + $0x8] sm:$0xf]
        %v939 = vld [vmem:[#allocation11 + $0xc] sm:$0xf]
        %v940 = vld [vmem:[#allocation11 + $0x10] sm:$0xf]
        %v941 = vld [vmem:[#allocation11 + $0x14] sm:$0xf]
        %v942 = vld [vmem:[#allocation11 + $0x18] sm:$0xf]
        %v943 = vld [vmem:[#allocation11 + $0x1c] sm:$0xf]
        %v944 = vld [vmem:[#allocation11 + $0x20] sm:$0xf]
        %v945 = vld [vmem:[#allocation11 + $0x24] sm:$0xf]
        %v946 = vld [vmem:[#allocation11 + $0x28] sm:$0xf]
        %v947 = vld [vmem:[#allocation11 + $0x2c] sm:$0xf]
        %v948 = vld [vmem:[#allocation11 + $0x30] sm:$0xf]
        %v949 = vld [vmem:[#allocation11 + $0x34] sm:$0xf]
        %v950 = vld [vmem:[#allocation11 + $0x38] sm:$0xf]
        %v951 = vld [vmem:[#allocation11 + $0x3c] sm:$0xf]
        %v952 = vld [vmem:[%s7] sm:$0x1]
        %v954 = vlaneseq
        %v955 = vshrl.u32 %v954, 7
        %v956 = vsub.s32 0, %v955
        %v957 = vrot.slane %v952, %v956
        %v991 = vunpack.c.l.b16 %v469
        %v992 = vunpack.c.l.b16 %v470
        %v993 = vunpack.c.l.b16 %v471
        %v994 = vunpack.c.l.b16 %v472
        %v995 = vunpack.c.l.b16 %v473
        %v996 = vunpack.c.l.b16 %v474
        %v997 = vunpack.c.l.b16 %v475
        %v998 = vunpack.c.l.b16 %v476
        %v999 = vunpack.c.l.b16 %v477
        %v1000 = vunpack.c.l.b16 %v478
        %v1001 = vunpack.c.l.b16 %v479
        %v1002 = vunpack.c.l.b16 %v480
        %v1003 = vunpack.c.l.b16 %v481
        %v1004 = vunpack.c.l.b16 %v482
        %v1005 = vunpack.c.l.b16 %v483
        %v1006 = vunpack.c.l.b16 %v484
        %v1007 = vunpack.c.l.b16 %v485
        %v1008 = vunpack.c.l.b16 %v486
        %v1009 = vunpack.c.l.b16 %v487
        %v1010 = vunpack.c.l.b16 %v488
        %v1011 = vunpack.c.l.b16 %v489
        %v1012 = vunpack.c.l.b16 %v490
        %v1013 = vunpack.c.l.b16 %v491
        %v1014 = vunpack.c.l.b16 %v492
        %v1015 = vunpack.c.l.b16 %v493
        %v1016 = vunpack.c.l.b16 %v494
        %v1017 = vunpack.c.l.b16 %v495
        %v1018 = vunpack.c.l.b16 %v496
        %v1019 = vunpack.c.l.b16 %v497
        %v1020 = vunpack.c.l.b16 %v498
        %v1021 = vunpack.c.l.b16 %v499
        %v1022 = vunpack.c.l.b16 %v500
        %v1023 = vpack.c.b16 %v992, %v991
        %v1024 = vpack.c.b16 %v994, %v993
        %v1025 = vpack.c.b16 %v996, %v995
        %v1026 = vpack.c.b16 %v998, %v997
        %v1027 = vpack.c.b16 %v1000, %v999
        %v1028 = vpack.c.b16 %v1002, %v1001
        %v1029 = vpack.c.b16 %v1004, %v1003
        %v1030 = vpack.c.b16 %v1006, %v1005
        %v1031 = vpack.c.b16 %v1008, %v1007
        %v1032 = vpack.c.b16 %v1010, %v1009
        %v1033 = vpack.c.b16 %v1012, %v1011
        %v1034 = vpack.c.b16 %v1014, %v1013
        %v1035 = vpack.c.b16 %v1016, %v1015
        %v1036 = vpack.c.b16 %v1018, %v1017
        %v1037 = vpack.c.b16 %v1020, %v1019
        %v1038 = vpack.c.b16 %v1022, %v1021
        %v1071 = vunpack.c.l.b16 %v936
        %v1072 = vunpack.c.l.b16 %v937
        %v1073 = vunpack.c.l.b16 %v938
        %v1074 = vunpack.c.l.b16 %v939
        %v1075 = vunpack.c.l.b16 %v940
        %v1076 = vunpack.c.l.b16 %v941
        %v1077 = vunpack.c.l.b16 %v942
        %v1078 = vunpack.c.l.b16 %v943
        %v1079 = vunpack.c.l.b16 %v944
        %v1080 = vunpack.c.l.b16 %v945
        %v1081 = vunpack.c.l.b16 %v946
        %v1082 = vunpack.c.l.b16 %v947
        %v1083 = vunpack.c.l.b16 %v948
        %v1084 = vunpack.c.l.b16 %v949
        %v1085 = vunpack.c.l.b16 %v950
        %v1086 = vunpack.c.l.b16 %v951
        %v1087 = vpack.c.b16 %v1072, %v1071
        %v1088 = vpack.c.b16 %v1074, %v1073
        %v1089 = vpack.c.b16 %v1076, %v1075
        %v1090 = vpack.c.b16 %v1078, %v1077
        %v1091 = vpack.c.b16 %v1080, %v1079
        %v1092 = vpack.c.b16 %v1082, %v1081
        %v1093 = vpack.c.b16 %v1084, %v1083
        %v1094 = vpack.c.b16 %v1086, %v1085
        %1103 = vmatprep.subr.bf16.mxu0 0
        %1104 = vmatpush1.bf16.msra.mxu0 %v1087
        %1105 = vmatprep.subr.bf16.mxu0 0
        %1106 = vmatpush1.bf16.msra.mxu0 %v1088
        %1107 = vmatprep.subr.bf16.mxu0 0
        %1108 = vmatpush1.bf16.msra.mxu0 %v1089
        %1109 = vmatprep.subr.bf16.mxu0 0
        %1110 = vmatpush1.bf16.msra.mxu0 %v1090
        %1111 = vmatprep.subr.bf16.mxu0 0
        %1112 = vmatpush1.bf16.msra.mxu0 %v1091
        %1113 = vmatprep.subr.bf16.mxu0 0
        %1114 = vmatpush1.bf16.msra.mxu0 %v1092
        %1115 = vmatprep.subr.bf16.mxu0 0
        %1116 = vmatpush1.bf16.msra.mxu0 %v1093
        %1117 = vmatprep.subr.bf16.mxu0 0
        %1118 = vmatpush1.bf16.msra.mxu0 %v1094
        %1119 = vmatprep.subr.bf16.mxu0 0
        %1120 = vmatpush1.bf16.msra.mxu0 0
        %1121 = vmatprep.subr.bf16.mxu0 0
        %1122 = vmatpush1.bf16.msra.mxu0 0
        %1123 = vmatprep.subr.bf16.mxu0 0
        %1124 = vmatpush1.bf16.msra.mxu0 0
        %1125 = vmatprep.subr.bf16.mxu0 0
        %1126 = vmatpush1.bf16.msra.mxu0 0
        %1127 = vmatprep.subr.bf16.mxu0 0
        %1128 = vmatpush1.bf16.msra.mxu0 0
        %1129 = vmatprep.subr.bf16.mxu0 0
        %1130 = vmatpush1.bf16.msra.mxu0 0
        %1131 = vmatprep.subr.bf16.mxu0 0
        %1132 = vmatpush1.bf16.msra.mxu0 0
        %1133 = vmatprep.subr.bf16.mxu0 0
        %1134 = vmatpush1.bf16.msra.mxu0 0
        %1135 = vmatprep.mubr.bf16.mxu0 0
        %1136 = vmatmul.mubr.bf16.gmra.mrb[0].mxu0 %v1023
        %v1137 = vpop.f32.mrb[0].mxu0
        %v1138 = vadd.f32 %v957, %v1137
        %v1139 = vpop.f32.mrb[0].mxu0
        %v1140 = vpop.f32.mrb[0].mxu0
        %v1141 = vadd.f32 %v957, %v1140
        %v1142 = vpop.f32.mrb[0].mxu0
        %1143 = vmatprep.mubr.bf16.mxu0 0
        %1144 = vmatmul.mubr.bf16.gmra.mrb[0].mxu0 %v1024
        %v1145 = vpop.f32.mrb[0].mxu0
        %v1146 = vadd.f32 %v957, %v1145
        %v1147 = vpop.f32.mrb[0].mxu0
        %v1148 = vpop.f32.mrb[0].mxu0
        %v1149 = vadd.f32 %v957, %v1148
        %v1150 = vpop.f32.mrb[0].mxu0
        %1151 = vmatprep.mubr.bf16.mxu0 0
        %1152 = vmatmul.mubr.bf16.gmra.mrb[0].mxu0 %v1025
        %v1153 = vpop.f32.mrb[0].mxu0
        %v1154 = vadd.f32 %v957, %v1153
        %v1155 = vpop.f32.mrb[0].mxu0
        %v1156 = vpop.f32.mrb[0].mxu0
        %v1157 = vadd.f32 %v957, %v1156
        %v1158 = vpop.f32.mrb[0].mxu0
        %1159 = vmatprep.mubr.bf16.mxu0 0
        %1160 = vmatmul.mubr.bf16.gmra.mrb[0].mxu0 %v1026
        %v1161 = vpop.f32.mrb[0].mxu0
        %v1162 = vadd.f32 %v957, %v1161
        %v1163 = vpop.f32.mrb[0].mxu0
        %v1164 = vpop.f32.mrb[0].mxu0
        %v1165 = vadd.f32 %v957, %v1164
        %v1166 = vpop.f32.mrb[0].mxu0
        %1167 = vmatprep.mubr.bf16.mxu0 0
        %1168 = vmatmul.mubr.bf16.gmra.mrb[0].mxu0 %v1027
        %v1169 = vpop.f32.mrb[0].mxu0
        %v1170 = vadd.f32 %v957, %v1169
        %v1171 = vpop.f32.mrb[0].mxu0
        %v1172 = vpop.f32.mrb[0].mxu0
        %v1173 = vadd.f32 %v957, %v1172
        %v1174 = vpop.f32.mrb[0].mxu0
        %1175 = vmatprep.mubr.bf16.mxu0 0
        %1176 = vmatmul.mubr.bf16.gmra.mrb[0].mxu0 %v1028
        %v1177 = vpop.f32.mrb[0].mxu0
        %v1178 = vadd.f32 %v957, %v1177
        %v1179 = vpop.f32.mrb[0].mxu0
        %v1180 = vpop.f32.mrb[0].mxu0
        %v1181 = vadd.f32 %v957, %v1180
        %v1182 = vpop.f32.mrb[0].mxu0
        %1183 = vmatprep.mubr.bf16.mxu0 0
        %1184 = vmatmul.mubr.bf16.gmra.mrb[0].mxu0 %v1029
        %v1185 = vpop.f32.mrb[0].mxu0
        %v1186 = vadd.f32 %v957, %v1185
        %v1187 = vpop.f32.mrb[0].mxu0
        %v1188 = vpop.f32.mrb[0].mxu0
        %v1189 = vadd.f32 %v957, %v1188
        %v1190 = vpop.f32.mrb[0].mxu0
        %1191 = vmatprep.mubr.bf16.mxu0 0
        %1192 = vmatmul.mubr.bf16.gmra.mrb[0].mxu0 %v1030
        %v1193 = vpop.f32.mrb[0].mxu0
        %v1194 = vadd.f32 %v957, %v1193
        %v1195 = vpop.f32.mrb[0].mxu0
        %v1196 = vpop.f32.mrb[0].mxu0
        %v1197 = vadd.f32 %v957, %v1196
        %v1198 = vpop.f32.mrb[0].mxu0
        %1199 = vmatprep.mubr.bf16.mxu0 0
        %1200 = vmatmul.mubr.bf16.gmra.mrb[0].mxu0 %v1031
        %v1201 = vpop.f32.mrb[0].mxu0
        %v1202 = vadd.f32 %v957, %v1201
        %v1203 = vpop.f32.mrb[0].mxu0
        %v1204 = vpop.f32.mrb[0].mxu0
        %v1205 = vadd.f32 %v957, %v1204
        %v1206 = vpop.f32.mrb[0].mxu0
        %1207 = vmatprep.mubr.bf16.mxu0 0
        %1208 = vmatmul.mubr.bf16.gmra.mrb[0].mxu0 %v1032
        %v1209 = vpop.f32.mrb[0].mxu0
        %v1210 = vadd.f32 %v957, %v1209
        %v1211 = vpop.f32.mrb[0].mxu0
        %v1212 = vpop.f32.mrb[0].mxu0
        %v1213 = vadd.f32 %v957, %v1212
        %v1214 = vpop.f32.mrb[0].mxu0
        %1215 = vmatprep.mubr.bf16.mxu0 0
        %1216 = vmatmul.mubr.bf16.gmra.mrb[0].mxu0 %v1033
        %v1217 = vpop.f32.mrb[0].mxu0
        %v1218 = vadd.f32 %v957, %v1217
        %v1219 = vpop.f32.mrb[0].mxu0
        %v1220 = vpop.f32.mrb[0].mxu0
        %v1221 = vadd.f32 %v957, %v1220
        %v1222 = vpop.f32.mrb[0].mxu0
        %1223 = vmatprep.mubr.bf16.mxu0 0
        %1224 = vmatmul.mubr.bf16.gmra.mrb[0].mxu0 %v1034
        %v1225 = vpop.f32.mrb[0].mxu0
        %v1226 = vadd.f32 %v957, %v1225
        %v1227 = vpop.f32.mrb[0].mxu0
        %v1228 = vpop.f32.mrb[0].mxu0
        %v1229 = vadd.f32 %v957, %v1228
        %v1230 = vpop.f32.mrb[0].mxu0
        %1231 = vmatprep.mubr.bf16.mxu0 0
        %1232 = vmatmul.mubr.bf16.gmra.mrb[0].mxu0 %v1035
        %v1233 = vpop.f32.mrb[0].mxu0
        %v1234 = vadd.f32 %v957, %v1233
        %v1235 = vpop.f32.mrb[0].mxu0
        %v1236 = vpop.f32.mrb[0].mxu0
        %v1237 = vadd.f32 %v957, %v1236
        %v1238 = vpop.f32.mrb[0].mxu0
        %1239 = vmatprep.mubr.bf16.mxu0 0
        %1240 = vmatmul.mubr.bf16.gmra.mrb[0].mxu0 %v1036
        %v1241 = vpop.f32.mrb[0].mxu0
        %v1242 = vadd.f32 %v957, %v1241
        %v1243 = vpop.f32.mrb[0].mxu0
        %v1244 = vpop.f32.mrb[0].mxu0
        %v1245 = vadd.f32 %v957, %v1244
        %v1246 = vpop.f32.mrb[0].mxu0
        %1247 = vmatprep.mubr.bf16.mxu0 0
        %1248 = vmatmul.mubr.bf16.gmra.mrb[0].mxu0 %v1037
        %v1249 = vpop.f32.mrb[0].mxu0
        %v1250 = vadd.f32 %v957, %v1249
        %v1251 = vpop.f32.mrb[0].mxu0
        %v1252 = vpop.f32.mrb[0].mxu0
        %v1253 = vadd.f32 %v957, %v1252
        %v1254 = vpop.f32.mrb[0].mxu0
        %1255 = vmatprep.mubr.bf16.mxu0 0
        %1256 = vmatmul.mubr.bf16.gmra.mrb[0].mxu0 %v1038
        %v1257 = vpop.f32.mrb[0].mxu0
        %v1258 = vadd.f32 %v957, %v1257
        %v1259 = vpop.f32.mrb[0].mxu0
        %v1260 = vpop.f32.mrb[0].mxu0
        %v1261 = vadd.f32 %v957, %v1260
        %v1262 = vpop.f32.mrb[0].mxu0
        %1263 = vdwg.mxu0
        %1264 = vst [vmem:[%s459] sm:$0xff] %v1138
        %1265 = vst [vmem:[%s459 + $0x8] sm:$0xff] %v1141
        %1266 = vst [vmem:[%s459 + $0x10] sm:$0xff] %v1146
        %1267 = vst [vmem:[%s459 + $0x18] sm:$0xff] %v1149
        %1268 = vst [vmem:[%s459 + $0x20] sm:$0xff] %v1154
        %1269 = vst [vmem:[%s459 + $0x28] sm:$0xff] %v1157
        %1270 = vst [vmem:[%s459 + $0x30] sm:$0xff] %v1162
        %1271 = vst [vmem:[%s459 + $0x38] sm:$0xff] %v1165
        %1272 = vst [vmem:[%s459 + $0x40] sm:$0xff] %v1170
        %1273 = vst [vmem:[%s459 + $0x48] sm:$0xff] %v1173
        %1274 = vst [vmem:[%s459 + $0x50] sm:$0xff] %v1178
        %1275 = vst [vmem:[%s459 + $0x58] sm:$0xff] %v1181
        %1276 = vst [vmem:[%s459 + $0x60] sm:$0xff] %v1186
        %1277 = vst [vmem:[%s459 + $0x68] sm:$0xff] %v1189
        %1278 = vst [vmem:[%s459 + $0x70] sm:$0xff] %v1194
        %1279 = vst [vmem:[%s459 + $0x78] sm:$0xff] %v1197
        %1280 = vst [vmem:[%s459 + $0x80] sm:$0xff] %v1202
        %1281 = vst [vmem:[%s459 + $0x88] sm:$0xff] %v1205
        %1282 = vst [vmem:[%s459 + $0x90] sm:$0xff] %v1210
        %1283 = vst [vmem:[%s459 + $0x98] sm:$0xff] %v1213
        %1284 = vst [vmem:[%s459 + $0xa0] sm:$0xff] %v1218
        %1285 = vst [vmem:[%s459 + $0xa8] sm:$0xff] %v1221
        %1286 = vst [vmem:[%s459 + $0xb0] sm:$0xff] %v1226
        %1287 = vst [vmem:[%s459 + $0xb8] sm:$0xff] %v1229
        %1288 = vst [vmem:[%s459 + $0xc0] sm:$0xff] %v1234
        %1289 = vst [vmem:[%s459 + $0xc8] sm:$0xff] %v1237
        %1290 = vst [vmem:[%s459 + $0xd0] sm:$0xff] %v1242
        %1291 = vst [vmem:[%s459 + $0xd8] sm:$0xff] %v1245
        %1292 = vst [vmem:[%s459 + $0xe0] sm:$0xff] %v1250
        %1293 = vst [vmem:[%s459 + $0xe8] sm:$0xff] %v1253
        %1294 = vst [vmem:[%s459 + $0xf0] sm:$0xff] %v1258
        %1295 = vst [vmem:[%s459 + $0xf8] sm:$0xff] %v1261
        %s1296 = sand.u32 %s221, 1
        %s1297 = scalar_lea.sflag [#allocation4], %s1296
        %s1298 = sand.u32 %s221, 1
        %s1299 = smul.addr %s1298, 64
        %s1300 = scalar_lea.vmem [#allocation13], %s1299
        %s1301 = sand.u32 %s247, 1
        %s1302 = scalar_lea.sflag [#allocation15], %s1301
        %s1303 = sand.u32 %s247, 1
        %s1304 = smul.addr %s1303, 256
        %s1305 = scalar_lea.vmem [#allocation14], %s1304
        // Predicated region
        $region77: #{tpu_custom_call.1} parent=51 // pred_check
          %p1306 = pneg %p231
        $region78: #{tpu_custom_call.1} parent=51 // pred_check_branch
          %1308 = sbr.rel (%p1306) target = $region80
        $region79: #{tpu_custom_call.1} parent=51 // pred_region
          %s1310 = ssub.s32 1024, 1024
          %1311 = vsyncadd %s1297, %s1310
          %s1312 = smul.addr %s35, 8
          %s1313 = smul.addr %s1312, 128
          %s1314 = scalar_lea.hbm %s8, %s1313
          %s1315 = sshll.u32 %s1300, 4
          %s1316 = int_to_ptr.vmem [resolvable:$true] %s1315
          %1321 = dma.vmem_to_hbm [thread:$0]  %s1316, 1024, %s1314, %s1297, 128, 128, 8
        $region80: #{tpu_custom_call.1} parent=51 // pred_fallthru
          _
        // Predicated region
        $region81: #{tpu_custom_call.1} parent=51 // pred_check
          %p1322 = pneg %p257
        $region82: #{tpu_custom_call.1} parent=51 // pred_check_branch
          %1324 = sbr.rel (%p1322) target = $region84
        $region83: #{tpu_custom_call.1} parent=51 // pred_region
          %s1326 = ssub.s32 4096, 4096
          %1327 = vsyncadd %s1302, %s1326
          %s1328 = smul.addr %s35, 32
          %s1329 = smul.addr %s1328, 128
          %s1330 = scalar_lea.hbm %s9, %s1329
          %s1331 = sshll.u32 %s1305, 4
          %s1332 = int_to_ptr.vmem [resolvable:$true] %s1331
          %1337 = dma.vmem_to_hbm [thread:$0]  %s1332, 4096, %s1330, %s1302, 128, 128, 8
        $region84: #{tpu_custom_call.1} parent=51 // pred_fallthru
          _
      $region52: #{tpu_custom_call.1} parent=5 // pred_fallthru
        _
      %p1338 = scmp.le.s32.totalorder 2, %s30
      // Predicated region
      $region85: #{tpu_custom_call.1} parent=5 // pred_check
        %p1339 = pneg %p1338
      $region86: #{tpu_custom_call.1} parent=5 // pred_check_branch
        %1341 = sbr.rel (%p1339) target = $region88
      $region87: #{tpu_custom_call.1} parent=5 // pred_region
        %s1342 = ssub.s32 %s30, 2
        // Predicated region
        $region89: #{tpu_custom_call.1} parent=87 // pred_check
          %p1343 = pneg %p237
        $region90: #{tpu_custom_call.1} parent=87 // pred_check_branch
          %1345 = sbr.rel (%p1343) target = $region92
        $region91: #{tpu_custom_call.1} parent=87 // pred_region
          %s1346 = sand.u32 %s222, 1
          %s1347 = scalar_lea.sflag [#allocation4], %s1346
          %s1348 = sand.u32 %s222, 1
          %s1349 = smul.addr %s1348, 64
          %s1350 = scalar_lea.vmem [#allocation13], %s1349
          %1351 = dma.done %s1347, 1024
        $region92: #{tpu_custom_call.1} parent=87 // pred_fallthru
          _
        // Predicated region
        $region93: #{tpu_custom_call.1} parent=87 // pred_check
          %p1352 = pneg %p263
        $region94: #{tpu_custom_call.1} parent=87 // pred_check_branch
          %1354 = sbr.rel (%p1352) target = $region96
        $region95: #{tpu_custom_call.1} parent=87 // pred_region
          %s1355 = sand.u32 %s248, 1
          %s1356 = scalar_lea.sflag [#allocation15], %s1355
          %s1357 = sand.u32 %s248, 1
          %s1358 = smul.addr %s1357, 256
          %s1359 = scalar_lea.vmem [#allocation14], %s1358
          %1360 = dma.done %s1356, 4096
        $region96: #{tpu_custom_call.1} parent=87 // pred_fallthru
          _
      $region88: #{tpu_custom_call.1} parent=5 // pred_fallthru
        _
    $region6: #{tpu_custom_call.1} parent=1 // loop_footer
      %s34 = sadd.s32 1, %s30
    $region7: #{tpu_custom_call.1} parent=1 // loop_footer_branch
      %29 = sbr.rel target = $region3
    $region8: #{tpu_custom_call.1} parent=1 // loop_exit
      _
    %1361 = vsyncpa [#allocation3], 1
    %s1362 = scalar_lea.sflag [#allocation3], 1
    %1363 = vsyncpa %s1362, 1
    %1364 = vsyncpa [#allocation6], 1
    %s1365 = scalar_lea.sflag [#allocation6], 1
    %1366 = vsyncpa %s1365, 1
    %1367 = vsyncpa [#allocation9], 1
    %1368 = vsyncpa [#allocation12], 1
    %1369 = vsyncpa [#allocation4], 1
    %s1370 = scalar_lea.sflag [#allocation4], 1
    %1371 = vsyncpa %s1370, 1
    %1372 = vsyncpa [#allocation15], 1
    %s1373 = scalar_lea.sflag [#allocation15], 1
    %1374 = vsyncpa %s1373, 1

</llo_original>
